<compile_context>
chip_gen: v6e
topology: v6e:2x2x1
jax: 0.10.0
libtpu: 0.0.40
codegen_flags: <defaults>
</compile_context>

<pallas_src>
import functools

import jax
import jax.numpy as jnp
from jax import lax
from jax.experimental import pallas as pl
from jax.experimental.pallas import tpu as pltpu


def _shift_w(x, sx):
    """out[..., w] = x[..., w - sx] with zero fill; sx in {-1, 0, 1}."""
    if sx == 0:
        return x
    td, h, w = x.shape
    zc = jnp.zeros((td, h, 1), x.dtype)
    if sx == 1:
        return jnp.concatenate([zc, x[:, :, : w - 1]], axis=2)
    return jnp.concatenate([x[:, :, 1:], zc], axis=2)


def _shift_h(x, sy):
    """out[:, h, :] = x[:, h - sy, :] with zero fill; sy in {-1, 0, 1}."""
    if sy == 0:
        return x
    td, h, w = x.shape
    zr = jnp.zeros((td, 1, w), x.dtype)
    if sy == 1:
        return jnp.concatenate([zr, x[:, : h - 1, :]], axis=1)
    return jnp.concatenate([x[:, 1:, :], zr], axis=1)


def _taps9(x):
    """taps[dy][dx][d, h, w] == x[d, h + dy - 1, w + dx - 1] (zero outside)."""
    wsh = [_shift_w(x, 1 - dx) for dx in range(3)]
    return [[_shift_h(wsh[dx], 1 - dy) for dx in range(3)] for dy in range(3)]


def _conv3x3_vpu(src, w_ref, b_ref, res):
    """res[co] + b[co] + sum_{ci,dy,dx} w[dy,dx,ci,co] * tap(src[ci], dy, dx).

    src, res : lists of Ch f32 arrays of shape (TD, H, W)
    w_ref    : SMEM ref, flat (9*Ch*Ch,) f32, row-major (dy, dx, ci, co)
    b_ref    : SMEM ref, (Ch,) f32
    """
    ch = len(src)
    taps = [_taps9(src[ci]) for ci in range(ch)]   # shared across all co
    outs = []
    for co in range(ch):
        acc = res[co] + b_ref[co]
        for ci in range(ch):
            for dy in range(3):
                for dx in range(3):
                    wgt = w_ref[((dy * 3 + dx) * ch + ci) * ch + co]
                    acc = acc + wgt * taps[ci][dy][dx]
        outs.append(acc)
    return outs


def _fused_revconv_kernel(wf_ref, bf_ref, wg_ref, bg_ref, x_ref, o_ref):
    """One (n, depth-tile) block of the fused reversible coupling.

    x_ref / o_ref : (1, C, TD, H, W) in VMEM; w*/b* refs are flat f32 in SMEM.
    """
    c = x_ref.shape[1]
    ch = c // 2

    x1 = [x_ref[0, ci].astype(jnp.float32) for ci in range(ch)]
    x2 = [x_ref[0, ch + ci].astype(jnp.float32) for ci in range(ch)]

    y1 = _conv3x3_vpu(x2, wf_ref, bf_ref, x1)   # y1 = x1 + f(x2)
    y2 = _conv3x3_vpu(y1, wg_ref, bg_ref, x2)   # y2 = x2 + g(y1)

    for ci in range(ch):
        o_ref[0, ci] = y1[ci].astype(o_ref.dtype)
        o_ref[0, ch + ci] = y2[ci].astype(o_ref.dtype)


def iconv2dxd_forward(x_ncdhw, params, *, depth_tile=None):
    """Forward of IConv2dXD(in_ch == out_ch, invert=True) on NCDHW input.

    x_ncdhw : (N, C, D, H, W)
    params  : dict with wf, wg of shape (3, 3, C//2, C//2) (HWIO) and
              bf, bg of shape (C//2,).
    """
    n, c, d, h, w = x_ncdhw.shape
    assert c % 2 == 0
    td = d if depth_tile is None else min(depth_tile, d)

    wf = params["wf"].astype(jnp.float32).reshape(-1)   # (9*Ch*Ch,)
    bf = params["bf"].astype(jnp.float32)
    wg = params["wg"].astype(jnp.float32).reshape(-1)
    bg = params["bg"].astype(jnp.float32)

    smem_spec = pl.BlockSpec(memory_space=pltpu.MemorySpace.SMEM)
    blk = (1, c, td, h, w)
    blk_map = lambda ni, di: (ni, 0, di, 0, 0)

    return pl.pallas_call(
        _fused_revconv_kernel,
        out_shape=jax.ShapeDtypeStruct((n, c, d, h, w), x_ncdhw.dtype),
        grid_spec=pltpu.PrefetchScalarGridSpec(
            num_scalar_prefetch=0,
            grid=(n, pl.cdiv(d, td)),
            in_specs=[smem_spec, smem_spec, smem_spec, smem_spec,
                      pl.BlockSpec(blk, blk_map)],
            out_specs=pl.BlockSpec(blk, blk_map),
        ),
        compiler_params=pltpu.CompilerParams(
            dimension_semantics=("parallel", "parallel"),
            vmem_limit_bytes=32 * 1024 * 1024),
    )(wf, bf, wg, bg, x_ncdhw)


def _reference_forward(x_ncdhw, params):
    """Pure-JAX reference using lax.conv_general_dilated."""
    n, c, d, h, w = x_ncdhw.shape
    ch = c // 2
    x = jnp.transpose(x_ncdhw, (0, 2, 3, 4, 1)).reshape(n * d, h, w, c)
    x1, x2 = x[..., :ch], x[..., ch:]

    def conv(v, wt, b):
        out = lax.conv_general_dilated(
            v, wt, window_strides=(1, 1), padding=((1, 1), (1, 1)),
            dimension_numbers=("NHWC", "HWIO", "NHWC"))
        return out + b.reshape(1, 1, 1, -1)

    y1 = x1 + conv(x2, params["wf"], params["bf"])
    y2 = x2 + conv(y1, params["wg"], params["bg"])
    y = jnp.concatenate([y1, y2], axis=-1).reshape(n, d, h, w, c)
    return jnp.transpose(y, (0, 4, 1, 2, 3))


if __name__ == "__main__":
    # Small shapes consistent with the module: IConv2dXD(4, 4, invert=True),
    # input is a 5-D NCDHW tensor for Conv3d with kernel (1, 3, 3).
    N, C, D, H, W = 2, 4, 3, 16, 16
    Ch = C // 2  # channels per reversible half

    key = jax.random.PRNGKey(0)
    kx, kwf, kbf, kwg, kbg = jax.random.split(key, 5)

    x = jax.random.normal(kx, (N, C, D, H, W), dtype=jnp.float32)

    # Deterministic param init.  PyTorch weight shape is (Cout, Cin, 1, 3, 3);
    # the equivalent HWIO (3, 3, Cin, Cout) layout is stored directly.
    scale = 0.1
    params = {
        "wf": scale * jax.random.normal(kwf, (3, 3, Ch, Ch), dtype=jnp.float32),
        "bf": scale * jax.random.normal(kbf, (Ch,), dtype=jnp.float32),
        "wg": scale * jax.random.normal(kwg, (3, 3, Ch, Ch), dtype=jnp.float32),
        "bg": scale * jax.random.normal(kbg, (Ch,), dtype=jnp.float32),
    }

    fwd = jax.jit(functools.partial(iconv2dxd_forward, params=params))
    out = jax.block_until_ready(fwd(x))

    ref = _reference_forward(x, params)
    assert out.shape == (N, C, D, H, W), out.shape
    max_err = float(jnp.max(jnp.abs(out - ref)))
    assert jnp.allclose(out, ref, atol=1e-4, rtol=1e-4), max_err

    print("KERNEL_OK")
</pallas_src>

<mosaic_0001>
module attributes {stable_mosaic.version = 11 : i64} {
  func.func @_fused_revconv_kernel(%arg0: i32, %arg1: i32, %arg2: memref<36xf32, #tpu.memory_space<smem>>, %arg3: memref<2xf32, #tpu.memory_space<smem>>, %arg4: memref<36xf32, #tpu.memory_space<smem>>, %arg5: memref<2xf32, #tpu.memory_space<smem>>, %arg6: memref<1x4x3x16x16xf32, #tpu.memory_space<vmem>>, %arg7: memref<1x4x3x16x16xf32, #tpu.memory_space<vmem>>) attributes {dimension_semantics = [#tpu.dimension_semantics<parallel>, #tpu.dimension_semantics<parallel>], iteration_bounds = array<i64: 2, 1>, scalar_prefetch = 0 : i64, scratch_operands = 0 : i64, tpu.core_type = #tpu.core_type<tc>, window_params = [{transform_indices = @transform_0, window_bounds = array<i64: 36>}, {transform_indices = @transform_1, window_bounds = array<i64: 2>}, {transform_indices = @transform_2, window_bounds = array<i64: 36>}, {transform_indices = @transform_3, window_bounds = array<i64: 2>}, {transform_indices = @transform_4, window_bounds = array<i64: 1, 4, 3, 16, 16>}, {transform_indices = @transform_5, window_bounds = array<i64: 1, 4, 3, 16, 16>}]} {
    %c0 = arith.constant 0 : index
    %c0_0 = arith.constant 0 : index
    %c0_1 = arith.constant 0 : index
    %c0_2 = arith.constant 0 : index
    %c0_3 = arith.constant 0 : index
    %0 = vector.load %arg6[%c0, %c0_0, %c0_1, %c0_2, %c0_3] : memref<1x4x3x16x16xf32, #tpu.memory_space<vmem>>, vector<1x1x3x16x16xf32>
    %1 = vector.shape_cast %0 : vector<1x1x3x16x16xf32> to vector<3x16x16xf32>
    %c0_4 = arith.constant 0 : index
    %c1 = arith.constant 1 : index
    %c0_5 = arith.constant 0 : index
    %c0_6 = arith.constant 0 : index
    %c0_7 = arith.constant 0 : index
    %2 = vector.load %arg6[%c0_4, %c1, %c0_5, %c0_6, %c0_7] : memref<1x4x3x16x16xf32, #tpu.memory_space<vmem>>, vector<1x1x3x16x16xf32>
    %3 = vector.shape_cast %2 : vector<1x1x3x16x16xf32> to vector<3x16x16xf32>
    %c0_8 = arith.constant 0 : index
    %c2 = arith.constant 2 : index
    %c0_9 = arith.constant 0 : index
    %c0_10 = arith.constant 0 : index
    %c0_11 = arith.constant 0 : index
    %4 = vector.load %arg6[%c0_8, %c2, %c0_9, %c0_10, %c0_11] : memref<1x4x3x16x16xf32, #tpu.memory_space<vmem>>, vector<1x1x3x16x16xf32>
    %5 = vector.shape_cast %4 : vector<1x1x3x16x16xf32> to vector<3x16x16xf32>
    %c0_12 = arith.constant 0 : index
    %c3 = arith.constant 3 : index
    %c0_13 = arith.constant 0 : index
    %c0_14 = arith.constant 0 : index
    %c0_15 = arith.constant 0 : index
    %6 = vector.load %arg6[%c0_12, %c3, %c0_13, %c0_14, %c0_15] : memref<1x4x3x16x16xf32, #tpu.memory_space<vmem>>, vector<1x1x3x16x16xf32>
    %7 = vector.shape_cast %6 : vector<1x1x3x16x16xf32> to vector<3x16x16xf32>
    %cst = arith.constant 0.000000e+00 : f32
    %8 = vector.broadcast %cst : f32 to vector<3x16x1xf32>
    %9 = vector.extract_strided_slice %5 {offsets = [0, 0, 0], sizes = [3, 16, 15], strides = [1, 1, 1]} : vector<3x16x16xf32> to vector<3x16x15xf32>
    %10 = tpu.concatenate %8, %9 in 2 : vector<3x16x1xf32>, vector<3x16x15xf32> -> vector<3x16x16xf32>
    %cst_16 = arith.constant 0.000000e+00 : f32
    %11 = vector.broadcast %cst_16 : f32 to vector<3x16x1xf32>
    %12 = vector.extract_strided_slice %5 {offsets = [0, 0, 1], sizes = [3, 16, 15], strides = [1, 1, 1]} : vector<3x16x16xf32> to vector<3x16x15xf32>
    %13 = tpu.concatenate %12, %11 in 2 : vector<3x16x15xf32>, vector<3x16x1xf32> -> vector<3x16x16xf32>
    %cst_17 = arith.constant 0.000000e+00 : f32
    %14 = vector.broadcast %cst_17 : f32 to vector<3x1x16xf32>
    %15 = vector.extract_strided_slice %10 {offsets = [0, 0, 0], sizes = [3, 15, 16], strides = [1, 1, 1]} : vector<3x16x16xf32> to vector<3x15x16xf32>
    %16 = tpu.concatenate %14, %15 in 1 : vector<3x1x16xf32>, vector<3x15x16xf32> -> vector<3x16x16xf32>
    %cst_18 = arith.constant 0.000000e+00 : f32
    %17 = vector.broadcast %cst_18 : f32 to vector<3x1x16xf32>
    %18 = vector.extract_strided_slice %5 {offsets = [0, 0, 0], sizes = [3, 15, 16], strides = [1, 1, 1]} : vector<3x16x16xf32> to vector<3x15x16xf32>
    %19 = tpu.concatenate %17, %18 in 1 : vector<3x1x16xf32>, vector<3x15x16xf32> -> vector<3x16x16xf32>
    %cst_19 = arith.constant 0.000000e+00 : f32
    %20 = vector.broadcast %cst_19 : f32 to vector<3x1x16xf32>
    %21 = vector.extract_strided_slice %13 {offsets = [0, 0, 0], sizes = [3, 15, 16], strides = [1, 1, 1]} : vector<3x16x16xf32> to vector<3x15x16xf32>
    %22 = tpu.concatenate %20, %21 in 1 : vector<3x1x16xf32>, vector<3x15x16xf32> -> vector<3x16x16xf32>
    %cst_20 = arith.constant 0.000000e+00 : f32
    %23 = vector.broadcast %cst_20 : f32 to vector<3x1x16xf32>
    %24 = vector.extract_strided_slice %10 {offsets = [0, 1, 0], sizes = [3, 15, 16], strides = [1, 1, 1]} : vector<3x16x16xf32> to vector<3x15x16xf32>
    %25 = tpu.concatenate %24, %23 in 1 : vector<3x15x16xf32>, vector<3x1x16xf32> -> vector<3x16x16xf32>
    %cst_21 = arith.constant 0.000000e+00 : f32
    %26 = vector.broadcast %cst_21 : f32 to vector<3x1x16xf32>
    %27 = vector.extract_strided_slice %5 {offsets = [0, 1, 0], sizes = [3, 15, 16], strides = [1, 1, 1]} : vector<3x16x16xf32> to vector<3x15x16xf32>
    %28 = tpu.concatenate %27, %26 in 1 : vector<3x15x16xf32>, vector<3x1x16xf32> -> vector<3x16x16xf32>
    %cst_22 = arith.constant 0.000000e+00 : f32
    %29 = vector.broadcast %cst_22 : f32 to vector<3x1x16xf32>
    %30 = vector.extract_strided_slice %13 {offsets = [0, 1, 0], sizes = [3, 15, 16], strides = [1, 1, 1]} : vector<3x16x16xf32> to vector<3x15x16xf32>
    %31 = tpu.concatenate %30, %29 in 1 : vector<3x15x16xf32>, vector<3x1x16xf32> -> vector<3x16x16xf32>
    %cst_23 = arith.constant 0.000000e+00 : f32
    %32 = vector.broadcast %cst_23 : f32 to vector<3x16x1xf32>
    %33 = vector.extract_strided_slice %7 {offsets = [0, 0, 0], sizes = [3, 16, 15], strides = [1, 1, 1]} : vector<3x16x16xf32> to vector<3x16x15xf32>
    %34 = tpu.concatenate %32, %33 in 2 : vector<3x16x1xf32>, vector<3x16x15xf32> -> vector<3x16x16xf32>
    %cst_24 = arith.constant 0.000000e+00 : f32
    %35 = vector.broadcast %cst_24 : f32 to vector<3x16x1xf32>
    %36 = vector.extract_strided_slice %7 {offsets = [0, 0, 1], sizes = [3, 16, 15], strides = [1, 1, 1]} : vector<3x16x16xf32> to vector<3x16x15xf32>
    %37 = tpu.concatenate %36, %35 in 2 : vector<3x16x15xf32>, vector<3x16x1xf32> -> vector<3x16x16xf32>
    %cst_25 = arith.constant 0.000000e+00 : f32
    %38 = vector.broadcast %cst_25 : f32 to vector<3x1x16xf32>
    %39 = vector.extract_strided_slice %34 {offsets = [0, 0, 0], sizes = [3, 15, 16], strides = [1, 1, 1]} : vector<3x16x16xf32> to vector<3x15x16xf32>
    %40 = tpu.concatenate %38, %39 in 1 : vector<3x1x16xf32>, vector<3x15x16xf32> -> vector<3x16x16xf32>
    %cst_26 = arith.constant 0.000000e+00 : f32
    %41 = vector.broadcast %cst_26 : f32 to vector<3x1x16xf32>
    %42 = vector.extract_strided_slice %7 {offsets = [0, 0, 0], sizes = [3, 15, 16], strides = [1, 1, 1]} : vector<3x16x16xf32> to vector<3x15x16xf32>
    %43 = tpu.concatenate %41, %42 in 1 : vector<3x1x16xf32>, vector<3x15x16xf32> -> vector<3x16x16xf32>
    %cst_27 = arith.constant 0.000000e+00 : f32
    %44 = vector.broadcast %cst_27 : f32 to vector<3x1x16xf32>
    %45 = vector.extract_strided_slice %37 {offsets = [0, 0, 0], sizes = [3, 15, 16], strides = [1, 1, 1]} : vector<3x16x16xf32> to vector<3x15x16xf32>
    %46 = tpu.concatenate %44, %45 in 1 : vector<3x1x16xf32>, vector<3x15x16xf32> -> vector<3x16x16xf32>
    %cst_28 = arith.constant 0.000000e+00 : f32
    %47 = vector.broadcast %cst_28 : f32 to vector<3x1x16xf32>
    %48 = vector.extract_strided_slice %34 {offsets = [0, 1, 0], sizes = [3, 15, 16], strides = [1, 1, 1]} : vector<3x16x16xf32> to vector<3x15x16xf32>
    %49 = tpu.concatenate %48, %47 in 1 : vector<3x15x16xf32>, vector<3x1x16xf32> -> vector<3x16x16xf32>
    %cst_29 = arith.constant 0.000000e+00 : f32
    %50 = vector.broadcast %cst_29 : f32 to vector<3x1x16xf32>
    %51 = vector.extract_strided_slice %7 {offsets = [0, 1, 0], sizes = [3, 15, 16], strides = [1, 1, 1]} : vector<3x16x16xf32> to vector<3x15x16xf32>
    %52 = tpu.concatenate %51, %50 in 1 : vector<3x15x16xf32>, vector<3x1x16xf32> -> vector<3x16x16xf32>
    %cst_30 = arith.constant 0.000000e+00 : f32
    %53 = vector.broadcast %cst_30 : f32 to vector<3x1x16xf32>
    %54 = vector.extract_strided_slice %37 {offsets = [0, 1, 0], sizes = [3, 15, 16], strides = [1, 1, 1]} : vector<3x16x16xf32> to vector<3x15x16xf32>
    %55 = tpu.concatenate %54, %53 in 1 : vector<3x15x16xf32>, vector<3x1x16xf32> -> vector<3x16x16xf32>
    %c0_31 = arith.constant 0 : index
    %56 = memref.load %arg3[%c0_31] : memref<2xf32, #tpu.memory_space<smem>>
    %57 = vector.broadcast %56 : f32 to vector<3x16x16xf32>
    %58 = arith.addf %1, %57 : vector<3x16x16xf32>
    %c0_32 = arith.constant 0 : index
    %59 = memref.load %arg2[%c0_32] : memref<36xf32, #tpu.memory_space<smem>>
    %60 = vector.broadcast %59 : f32 to vector<3x16x16xf32>
    %61 = arith.mulf %60, %16 : vector<3x16x16xf32>
    %62 = arith.addf %58, %61 : vector<3x16x16xf32>
    %c4 = arith.constant 4 : index
    %63 = memref.load %arg2[%c4] : memref<36xf32, #tpu.memory_space<smem>>
    %64 = vector.broadcast %63 : f32 to vector<3x16x16xf32>
    %65 = arith.mulf %64, %19 : vector<3x16x16xf32>
    %66 = arith.addf %62, %65 : vector<3x16x16xf32>
    %c8 = arith.constant 8 : index
    %67 = memref.load %arg2[%c8] : memref<36xf32, #tpu.memory_space<smem>>
    %68 = vector.broadcast %67 : f32 to vector<3x16x16xf32>
    %69 = arith.mulf %68, %22 : vector<3x16x16xf32>
    %70 = arith.addf %66, %69 : vector<3x16x16xf32>
    %c12 = arith.constant 12 : index
    %71 = memref.load %arg2[%c12] : memref<36xf32, #tpu.memory_space<smem>>
    %72 = vector.broadcast %71 : f32 to vector<3x16x16xf32>
    %73 = arith.mulf %72, %10 : vector<3x16x16xf32>
    %74 = arith.addf %70, %73 : vector<3x16x16xf32>
    %c16 = arith.constant 16 : index
    %75 = memref.load %arg2[%c16] : memref<36xf32, #tpu.memory_space<smem>>
    %76 = vector.broadcast %75 : f32 to vector<3x16x16xf32>
    %77 = arith.mulf %76, %5 : vector<3x16x16xf32>
    %78 = arith.addf %74, %77 : vector<3x16x16xf32>
    %c20 = arith.constant 20 : index
    %79 = memref.load %arg2[%c20] : memref<36xf32, #tpu.memory_space<smem>>
    %80 = vector.broadcast %79 : f32 to vector<3x16x16xf32>
    %81 = arith.mulf %80, %13 : vector<3x16x16xf32>
    %82 = arith.addf %78, %81 : vector<3x16x16xf32>
    %c24 = arith.constant 24 : index
    %83 = memref.load %arg2[%c24] : memref<36xf32, #tpu.memory_space<smem>>
    %84 = vector.broadcast %83 : f32 to vector<3x16x16xf32>
    %85 = arith.mulf %84, %25 : vector<3x16x16xf32>
    %86 = arith.addf %82, %85 : vector<3x16x16xf32>
    %c28 = arith.constant 28 : index
    %87 = memref.load %arg2[%c28] : memref<36xf32, #tpu.memory_space<smem>>
    %88 = vector.broadcast %87 : f32 to vector<3x16x16xf32>
    %89 = arith.mulf %88, %28 : vector<3x16x16xf32>
    %90 = arith.addf %86, %89 : vector<3x16x16xf32>
    %c32 = arith.constant 32 : index
    %91 = memref.load %arg2[%c32] : memref<36xf32, #tpu.memory_space<smem>>
    %92 = vector.broadcast %91 : f32 to vector<3x16x16xf32>
    %93 = arith.mulf %92, %31 : vector<3x16x16xf32>
    %94 = arith.addf %90, %93 : vector<3x16x16xf32>
    %c2_33 = arith.constant 2 : index
    %95 = memref.load %arg2[%c2_33] : memref<36xf32, #tpu.memory_space<smem>>
    %96 = vector.broadcast %95 : f32 to vector<3x16x16xf32>
    %97 = arith.mulf %96, %40 : vector<3x16x16xf32>
    %98 = arith.addf %94, %97 : vector<3x16x16xf32>
    %c6 = arith.constant 6 : index
    %99 = memref.load %arg2[%c6] : memref<36xf32, #tpu.memory_space<smem>>
    %100 = vector.broadcast %99 : f32 to vector<3x16x16xf32>
    %101 = arith.mulf %100, %43 : vector<3x16x16xf32>
    %102 = arith.addf %98, %101 : vector<3x16x16xf32>
    %c10 = arith.constant 10 : index
    %103 = memref.load %arg2[%c10] : memref<36xf32, #tpu.memory_space<smem>>
    %104 = vector.broadcast %103 : f32 to vector<3x16x16xf32>
    %105 = arith.mulf %104, %46 : vector<3x16x16xf32>
    %106 = arith.addf %102, %105 : vector<3x16x16xf32>
    %c14 = arith.constant 14 : index
    %107 = memref.load %arg2[%c14] : memref<36xf32, #tpu.memory_space<smem>>
    %108 = vector.broadcast %107 : f32 to vector<3x16x16xf32>
    %109 = arith.mulf %108, %34 : vector<3x16x16xf32>
    %110 = arith.addf %106, %109 : vector<3x16x16xf32>
    %c18 = arith.constant 18 : index
    %111 = memref.load %arg2[%c18] : memref<36xf32, #tpu.memory_space<smem>>
    %112 = vector.broadcast %111 : f32 to vector<3x16x16xf32>
    %113 = arith.mulf %112, %7 : vector<3x16x16xf32>
    %114 = arith.addf %110, %113 : vector<3x16x16xf32>
    %c22 = arith.constant 22 : index
    %115 = memref.load %arg2[%c22] : memref<36xf32, #tpu.memory_space<smem>>
    %116 = vector.broadcast %115 : f32 to vector<3x16x16xf32>
    %117 = arith.mulf %116, %37 : vector<3x16x16xf32>
    %118 = arith.addf %114, %117 : vector<3x16x16xf32>
    %c26 = arith.constant 26 : index
    %119 = memref.load %arg2[%c26] : memref<36xf32, #tpu.memory_space<smem>>
    %120 = vector.broadcast %119 : f32 to vector<3x16x16xf32>
    %121 = arith.mulf %120, %49 : vector<3x16x16xf32>
    %122 = arith.addf %118, %121 : vector<3x16x16xf32>
    %c30 = arith.constant 30 : index
    %123 = memref.load %arg2[%c30] : memref<36xf32, #tpu.memory_space<smem>>
    %124 = vector.broadcast %123 : f32 to vector<3x16x16xf32>
    %125 = arith.mulf %124, %52 : vector<3x16x16xf32>
    %126 = arith.addf %122, %125 : vector<3x16x16xf32>
    %c34 = arith.constant 34 : index
    %127 = memref.load %arg2[%c34] : memref<36xf32, #tpu.memory_space<smem>>
    %128 = vector.broadcast %127 : f32 to vector<3x16x16xf32>
    %129 = arith.mulf %128, %55 : vector<3x16x16xf32>
    %130 = arith.addf %126, %129 : vector<3x16x16xf32>
    %c1_34 = arith.constant 1 : index
    %131 = memref.load %arg3[%c1_34] : memref<2xf32, #tpu.memory_space<smem>>
    %132 = vector.broadcast %131 : f32 to vector<3x16x16xf32>
    %133 = arith.addf %3, %132 : vector<3x16x16xf32>
    %c1_35 = arith.constant 1 : index
    %134 = memref.load %arg2[%c1_35] : memref<36xf32, #tpu.memory_space<smem>>
    %135 = vector.broadcast %134 : f32 to vector<3x16x16xf32>
    %136 = arith.mulf %135, %16 : vector<3x16x16xf32>
    %137 = arith.addf %133, %136 : vector<3x16x16xf32>
    %c5 = arith.constant 5 : index
    %138 = memref.load %arg2[%c5] : memref<36xf32, #tpu.memory_space<smem>>
    %139 = vector.broadcast %138 : f32 to vector<3x16x16xf32>
    %140 = arith.mulf %139, %19 : vector<3x16x16xf32>
    %141 = arith.addf %137, %140 : vector<3x16x16xf32>
    %c9 = arith.constant 9 : index
    %142 = memref.load %arg2[%c9] : memref<36xf32, #tpu.memory_space<smem>>
    %143 = vector.broadcast %142 : f32 to vector<3x16x16xf32>
    %144 = arith.mulf %143, %22 : vector<3x16x16xf32>
    %145 = arith.addf %141, %144 : vector<3x16x16xf32>
    %c13 = arith.constant 13 : index
    %146 = memref.load %arg2[%c13] : memref<36xf32, #tpu.memory_space<smem>>
    %147 = vector.broadcast %146 : f32 to vector<3x16x16xf32>
    %148 = arith.mulf %147, %10 : vector<3x16x16xf32>
    %149 = arith.addf %145, %148 : vector<3x16x16xf32>
    %c17 = arith.constant 17 : index
    %150 = memref.load %arg2[%c17] : memref<36xf32, #tpu.memory_space<smem>>
    %151 = vector.broadcast %150 : f32 to vector<3x16x16xf32>
    %152 = arith.mulf %151, %5 : vector<3x16x16xf32>
    %153 = arith.addf %149, %152 : vector<3x16x16xf32>
    %c21 = arith.constant 21 : index
    %154 = memref.load %arg2[%c21] : memref<36xf32, #tpu.memory_space<smem>>
    %155 = vector.broadcast %154 : f32 to vector<3x16x16xf32>
    %156 = arith.mulf %155, %13 : vector<3x16x16xf32>
    %157 = arith.addf %153, %156 : vector<3x16x16xf32>
    %c25 = arith.constant 25 : index
    %158 = memref.load %arg2[%c25] : memref<36xf32, #tpu.memory_space<smem>>
    %159 = vector.broadcast %158 : f32 to vector<3x16x16xf32>
    %160 = arith.mulf %159, %25 : vector<3x16x16xf32>
    %161 = arith.addf %157, %160 : vector<3x16x16xf32>
    %c29 = arith.constant 29 : index
    %162 = memref.load %arg2[%c29] : memref<36xf32, #tpu.memory_space<smem>>
    %163 = vector.broadcast %162 : f32 to vector<3x16x16xf32>
    %164 = arith.mulf %163, %28 : vector<3x16x16xf32>
    %165 = arith.addf %161, %164 : vector<3x16x16xf32>
    %c33 = arith.constant 33 : index
    %166 = memref.load %arg2[%c33] : memref<36xf32, #tpu.memory_space<smem>>
    %167 = vector.broadcast %166 : f32 to vector<3x16x16xf32>
    %168 = arith.mulf %167, %31 : vector<3x16x16xf32>
    %169 = arith.addf %165, %168 : vector<3x16x16xf32>
    %c3_36 = arith.constant 3 : index
    %170 = memref.load %arg2[%c3_36] : memref<36xf32, #tpu.memory_space<smem>>
    %171 = vector.broadcast %170 : f32 to vector<3x16x16xf32>
    %172 = arith.mulf %171, %40 : vector<3x16x16xf32>
    %173 = arith.addf %169, %172 : vector<3x16x16xf32>
    %c7 = arith.constant 7 : index
    %174 = memref.load %arg2[%c7] : memref<36xf32, #tpu.memory_space<smem>>
    %175 = vector.broadcast %174 : f32 to vector<3x16x16xf32>
    %176 = arith.mulf %175, %43 : vector<3x16x16xf32>
    %177 = arith.addf %173, %176 : vector<3x16x16xf32>
    %c11 = arith.constant 11 : index
    %178 = memref.load %arg2[%c11] : memref<36xf32, #tpu.memory_space<smem>>
    %179 = vector.broadcast %178 : f32 to vector<3x16x16xf32>
    %180 = arith.mulf %179, %46 : vector<3x16x16xf32>
    %181 = arith.addf %177, %180 : vector<3x16x16xf32>
    %c15 = arith.constant 15 : index
    %182 = memref.load %arg2[%c15] : memref<36xf32, #tpu.memory_space<smem>>
    %183 = vector.broadcast %182 : f32 to vector<3x16x16xf32>
    %184 = arith.mulf %183, %34 : vector<3x16x16xf32>
    %185 = arith.addf %181, %184 : vector<3x16x16xf32>
    %c19 = arith.constant 19 : index
    %186 = memref.load %arg2[%c19] : memref<36xf32, #tpu.memory_space<smem>>
    %187 = vector.broadcast %186 : f32 to vector<3x16x16xf32>
    %188 = arith.mulf %187, %7 : vector<3x16x16xf32>
    %189 = arith.addf %185, %188 : vector<3x16x16xf32>
    %c23 = arith.constant 23 : index
    %190 = memref.load %arg2[%c23] : memref<36xf32, #tpu.memory_space<smem>>
    %191 = vector.broadcast %190 : f32 to vector<3x16x16xf32>
    %192 = arith.mulf %191, %37 : vector<3x16x16xf32>
    %193 = arith.addf %189, %192 : vector<3x16x16xf32>
    %c27 = arith.constant 27 : index
    %194 = memref.load %arg2[%c27] : memref<36xf32, #tpu.memory_space<smem>>
    %195 = vector.broadcast %194 : f32 to vector<3x16x16xf32>
    %196 = arith.mulf %195, %49 : vector<3x16x16xf32>
    %197 = arith.addf %193, %196 : vector<3x16x16xf32>
    %c31 = arith.constant 31 : index
    %198 = memref.load %arg2[%c31] : memref<36xf32, #tpu.memory_space<smem>>
    %199 = vector.broadcast %198 : f32 to vector<3x16x16xf32>
    %200 = arith.mulf %199, %52 : vector<3x16x16xf32>
    %201 = arith.addf %197, %200 : vector<3x16x16xf32>
    %c35 = arith.constant 35 : index
    %202 = memref.load %arg2[%c35] : memref<36xf32, #tpu.memory_space<smem>>
    %203 = vector.broadcast %202 : f32 to vector<3x16x16xf32>
    %204 = arith.mulf %203, %55 : vector<3x16x16xf32>
    %205 = arith.addf %201, %204 : vector<3x16x16xf32>
    %cst_37 = arith.constant 0.000000e+00 : f32
    %206 = vector.broadcast %cst_37 : f32 to vector<3x16x1xf32>
    %207 = vector.extract_strided_slice %130 {offsets = [0, 0, 0], sizes = [3, 16, 15], strides = [1, 1, 1]} : vector<3x16x16xf32> to vector<3x16x15xf32>
    %208 = tpu.concatenate %206, %207 in 2 : vector<3x16x1xf32>, vector<3x16x15xf32> -> vector<3x16x16xf32>
    %cst_38 = arith.constant 0.000000e+00 : f32
    %209 = vector.broadcast %cst_38 : f32 to vector<3x16x1xf32>
    %210 = vector.extract_strided_slice %130 {offsets = [0, 0, 1], sizes = [3, 16, 15], strides = [1, 1, 1]} : vector<3x16x16xf32> to vector<3x16x15xf32>
    %211 = tpu.concatenate %210, %209 in 2 : vector<3x16x15xf32>, vector<3x16x1xf32> -> vector<3x16x16xf32>
    %cst_39 = arith.constant 0.000000e+00 : f32
    %212 = vector.broadcast %cst_39 : f32 to vector<3x1x16xf32>
    %213 = vector.extract_strided_slice %208 {offsets = [0, 0, 0], sizes = [3, 15, 16], strides = [1, 1, 1]} : vector<3x16x16xf32> to vector<3x15x16xf32>
    %214 = tpu.concatenate %212, %213 in 1 : vector<3x1x16xf32>, vector<3x15x16xf32> -> vector<3x16x16xf32>
    %cst_40 = arith.constant 0.000000e+00 : f32
    %215 = vector.broadcast %cst_40 : f32 to vector<3x1x16xf32>
    %216 = vector.extract_strided_slice %130 {offsets = [0, 0, 0], sizes = [3, 15, 16], strides = [1, 1, 1]} : vector<3x16x16xf32> to vector<3x15x16xf32>
    %217 = tpu.concatenate %215, %216 in 1 : vector<3x1x16xf32>, vector<3x15x16xf32> -> vector<3x16x16xf32>
    %cst_41 = arith.constant 0.000000e+00 : f32
    %218 = vector.broadcast %cst_41 : f32 to vector<3x1x16xf32>
    %219 = vector.extract_strided_slice %211 {offsets = [0, 0, 0], sizes = [3, 15, 16], strides = [1, 1, 1]} : vector<3x16x16xf32> to vector<3x15x16xf32>
    %220 = tpu.concatenate %218, %219 in 1 : vector<3x1x16xf32>, vector<3x15x16xf32> -> vector<3x16x16xf32>
    %cst_42 = arith.constant 0.000000e+00 : f32
    %221 = vector.broadcast %cst_42 : f32 to vector<3x1x16xf32>
    %222 = vector.extract_strided_slice %208 {offsets = [0, 1, 0], sizes = [3, 15, 16], strides = [1, 1, 1]} : vector<3x16x16xf32> to vector<3x15x16xf32>
    %223 = tpu.concatenate %222, %221 in 1 : vector<3x15x16xf32>, vector<3x1x16xf32> -> vector<3x16x16xf32>
    %cst_43 = arith.constant 0.000000e+00 : f32
    %224 = vector.broadcast %cst_43 : f32 to vector<3x1x16xf32>
    %225 = vector.extract_strided_slice %130 {offsets = [0, 1, 0], sizes = [3, 15, 16], strides = [1, 1, 1]} : vector<3x16x16xf32> to vector<3x15x16xf32>
    %226 = tpu.concatenate %225, %224 in 1 : vector<3x15x16xf32>, vector<3x1x16xf32> -> vector<3x16x16xf32>
    %cst_44 = arith.constant 0.000000e+00 : f32
    %227 = vector.broadcast %cst_44 : f32 to vector<3x1x16xf32>
    %228 = vector.extract_strided_slice %211 {offsets = [0, 1, 0], sizes = [3, 15, 16], strides = [1, 1, 1]} : vector<3x16x16xf32> to vector<3x15x16xf32>
    %229 = tpu.concatenate %228, %227 in 1 : vector<3x15x16xf32>, vector<3x1x16xf32> -> vector<3x16x16xf32>
    %cst_45 = arith.constant 0.000000e+00 : f32
    %230 = vector.broadcast %cst_45 : f32 to vector<3x16x1xf32>
    %231 = vector.extract_strided_slice %205 {offsets = [0, 0, 0], sizes = [3, 16, 15], strides = [1, 1, 1]} : vector<3x16x16xf32> to vector<3x16x15xf32>
    %232 = tpu.concatenate %230, %231 in 2 : vector<3x16x1xf32>, vector<3x16x15xf32> -> vector<3x16x16xf32>
    %cst_46 = arith.constant 0.000000e+00 : f32
    %233 = vector.broadcast %cst_46 : f32 to vector<3x16x1xf32>
    %234 = vector.extract_strided_slice %205 {offsets = [0, 0, 1], sizes = [3, 16, 15], strides = [1, 1, 1]} : vector<3x16x16xf32> to vector<3x16x15xf32>
    %235 = tpu.concatenate %234, %233 in 2 : vector<3x16x15xf32>, vector<3x16x1xf32> -> vector<3x16x16xf32>
    %cst_47 = arith.constant 0.000000e+00 : f32
    %236 = vector.broadcast %cst_47 : f32 to vector<3x1x16xf32>
    %237 = vector.extract_strided_slice %232 {offsets = [0, 0, 0], sizes = [3, 15, 16], strides = [1, 1, 1]} : vector<3x16x16xf32> to vector<3x15x16xf32>
    %238 = tpu.concatenate %236, %237 in 1 : vector<3x1x16xf32>, vector<3x15x16xf32> -> vector<3x16x16xf32>
    %cst_48 = arith.constant 0.000000e+00 : f32
    %239 = vector.broadcast %cst_48 : f32 to vector<3x1x16xf32>
    %240 = vector.extract_strided_slice %205 {offsets = [0, 0, 0], sizes = [3, 15, 16], strides = [1, 1, 1]} : vector<3x16x16xf32> to vector<3x15x16xf32>
    %241 = tpu.concatenate %239, %240 in 1 : vector<3x1x16xf32>, vector<3x15x16xf32> -> vector<3x16x16xf32>
    %cst_49 = arith.constant 0.000000e+00 : f32
    %242 = vector.broadcast %cst_49 : f32 to vector<3x1x16xf32>
    %243 = vector.extract_strided_slice %235 {offsets = [0, 0, 0], sizes = [3, 15, 16], strides = [1, 1, 1]} : vector<3x16x16xf32> to vector<3x15x16xf32>
    %244 = tpu.concatenate %242, %243 in 1 : vector<3x1x16xf32>, vector<3x15x16xf32> -> vector<3x16x16xf32>
    %cst_50 = arith.constant 0.000000e+00 : f32
    %245 = vector.broadcast %cst_50 : f32 to vector<3x1x16xf32>
    %246 = vector.extract_strided_slice %232 {offsets = [0, 1, 0], sizes = [3, 15, 16], strides = [1, 1, 1]} : vector<3x16x16xf32> to vector<3x15x16xf32>
    %247 = tpu.concatenate %246, %245 in 1 : vector<3x15x16xf32>, vector<3x1x16xf32> -> vector<3x16x16xf32>
    %cst_51 = arith.constant 0.000000e+00 : f32
    %248 = vector.broadcast %cst_51 : f32 to vector<3x1x16xf32>
    %249 = vector.extract_strided_slice %205 {offsets = [0, 1, 0], sizes = [3, 15, 16], strides = [1, 1, 1]} : vector<3x16x16xf32> to vector<3x15x16xf32>
    %250 = tpu.concatenate %249, %248 in 1 : vector<3x15x16xf32>, vector<3x1x16xf32> -> vector<3x16x16xf32>
    %cst_52 = arith.constant 0.000000e+00 : f32
    %251 = vector.broadcast %cst_52 : f32 to vector<3x1x16xf32>
    %252 = vector.extract_strided_slice %235 {offsets = [0, 1, 0], sizes = [3, 15, 16], strides = [1, 1, 1]} : vector<3x16x16xf32> to vector<3x15x16xf32>
    %253 = tpu.concatenate %252, %251 in 1 : vector<3x15x16xf32>, vector<3x1x16xf32> -> vector<3x16x16xf32>
    %c0_53 = arith.constant 0 : index
    %254 = memref.load %arg5[%c0_53] : memref<2xf32, #tpu.memory_space<smem>>
    %255 = vector.broadcast %254 : f32 to vector<3x16x16xf32>
    %256 = arith.addf %5, %255 : vector<3x16x16xf32>
    %c0_54 = arith.constant 0 : index
    %257 = memref.load %arg4[%c0_54] : memref<36xf32, #tpu.memory_space<smem>>
    %258 = vector.broadcast %257 : f32 to vector<3x16x16xf32>
    %259 = arith.mulf %258, %214 : vector<3x16x16xf32>
    %260 = arith.addf %256, %259 : vector<3x16x16xf32>
    %c4_55 = arith.constant 4 : index
    %261 = memref.load %arg4[%c4_55] : memref<36xf32, #tpu.memory_space<smem>>
    %262 = vector.broadcast %261 : f32 to vector<3x16x16xf32>
    %263 = arith.mulf %262, %217 : vector<3x16x16xf32>
    %264 = arith.addf %260, %263 : vector<3x16x16xf32>
    %c8_56 = arith.constant 8 : index
    %265 = memref.load %arg4[%c8_56] : memref<36xf32, #tpu.memory_space<smem>>
    %266 = vector.broadcast %265 : f32 to vector<3x16x16xf32>
    %267 = arith.mulf %266, %220 : vector<3x16x16xf32>
    %268 = arith.addf %264, %267 : vector<3x16x16xf32>
    %c12_57 = arith.constant 12 : index
    %269 = memref.load %arg4[%c12_57] : memref<36xf32, #tpu.memory_space<smem>>
    %270 = vector.broadcast %269 : f32 to vector<3x16x16xf32>
    %271 = arith.mulf %270, %208 : vector<3x16x16xf32>
    %272 = arith.addf %268, %271 : vector<3x16x16xf32>
    %c16_58 = arith.constant 16 : index
    %273 = memref.load %arg4[%c16_58] : memref<36xf32, #tpu.memory_space<smem>>
    %274 = vector.broadcast %273 : f32 to vector<3x16x16xf32>
    %275 = arith.mulf %274, %130 : vector<3x16x16xf32>
    %276 = arith.addf %272, %275 : vector<3x16x16xf32>
    %c20_59 = arith.constant 20 : index
    %277 = memref.load %arg4[%c20_59] : memref<36xf32, #tpu.memory_space<smem>>
    %278 = vector.broadcast %277 : f32 to vector<3x16x16xf32>
    %279 = arith.mulf %278, %211 : vector<3x16x16xf32>
    %280 = arith.addf %276, %279 : vector<3x16x16xf32>
    %c24_60 = arith.constant 24 : index
    %281 = memref.load %arg4[%c24_60] : memref<36xf32, #tpu.memory_space<smem>>
    %282 = vector.broadcast %281 : f32 to vector<3x16x16xf32>
    %283 = arith.mulf %282, %223 : vector<3x16x16xf32>
    %284 = arith.addf %280, %283 : vector<3x16x16xf32>
    %c28_61 = arith.constant 28 : index
    %285 = memref.load %arg4[%c28_61] : memref<36xf32, #tpu.memory_space<smem>>
    %286 = vector.broadcast %285 : f32 to vector<3x16x16xf32>
    %287 = arith.mulf %286, %226 : vector<3x16x16xf32>
    %288 = arith.addf %284, %287 : vector<3x16x16xf32>
    %c32_62 = arith.constant 32 : index
    %289 = memref.load %arg4[%c32_62] : memref<36xf32, #tpu.memory_space<smem>>
    %290 = vector.broadcast %289 : f32 to vector<3x16x16xf32>
    %291 = arith.mulf %290, %229 : vector<3x16x16xf32>
    %292 = arith.addf %288, %291 : vector<3x16x16xf32>
    %c2_63 = arith.constant 2 : index
    %293 = memref.load %arg4[%c2_63] : memref<36xf32, #tpu.memory_space<smem>>
    %294 = vector.broadcast %293 : f32 to vector<3x16x16xf32>
    %295 = arith.mulf %294, %238 : vector<3x16x16xf32>
    %296 = arith.addf %292, %295 : vector<3x16x16xf32>
    %c6_64 = arith.constant 6 : index
    %297 = memref.load %arg4[%c6_64] : memref<36xf32, #tpu.memory_space<smem>>
    %298 = vector.broadcast %297 : f32 to vector<3x16x16xf32>
    %299 = arith.mulf %298, %241 : vector<3x16x16xf32>
    %300 = arith.addf %296, %299 : vector<3x16x16xf32>
    %c10_65 = arith.constant 10 : index
    %301 = memref.load %arg4[%c10_65] : memref<36xf32, #tpu.memory_space<smem>>
    %302 = vector.broadcast %301 : f32 to vector<3x16x16xf32>
    %303 = arith.mulf %302, %244 : vector<3x16x16xf32>
    %304 = arith.addf %300, %303 : vector<3x16x16xf32>
    %c14_66 = arith.constant 14 : index
    %305 = memref.load %arg4[%c14_66] : memref<36xf32, #tpu.memory_space<smem>>
    %306 = vector.broadcast %305 : f32 to vector<3x16x16xf32>
    %307 = arith.mulf %306, %232 : vector<3x16x16xf32>
    %308 = arith.addf %304, %307 : vector<3x16x16xf32>
    %c18_67 = arith.constant 18 : index
    %309 = memref.load %arg4[%c18_67] : memref<36xf32, #tpu.memory_space<smem>>
    %310 = vector.broadcast %309 : f32 to vector<3x16x16xf32>
    %311 = arith.mulf %310, %205 : vector<3x16x16xf32>
    %312 = arith.addf %308, %311 : vector<3x16x16xf32>
    %c22_68 = arith.constant 22 : index
    %313 = memref.load %arg4[%c22_68] : memref<36xf32, #tpu.memory_space<smem>>
    %314 = vector.broadcast %313 : f32 to vector<3x16x16xf32>
    %315 = arith.mulf %314, %235 : vector<3x16x16xf32>
    %316 = arith.addf %312, %315 : vector<3x16x16xf32>
    %c26_69 = arith.constant 26 : index
    %317 = memref.load %arg4[%c26_69] : memref<36xf32, #tpu.memory_space<smem>>
    %318 = vector.broadcast %317 : f32 to vector<3x16x16xf32>
    %319 = arith.mulf %318, %247 : vector<3x16x16xf32>
    %320 = arith.addf %316, %319 : vector<3x16x16xf32>
    %c30_70 = arith.constant 30 : index
    %321 = memref.load %arg4[%c30_70] : memref<36xf32, #tpu.memory_space<smem>>
    %322 = vector.broadcast %321 : f32 to vector<3x16x16xf32>
    %323 = arith.mulf %322, %250 : vector<3x16x16xf32>
    %324 = arith.addf %320, %323 : vector<3x16x16xf32>
    %c34_71 = arith.constant 34 : index
    %325 = memref.load %arg4[%c34_71] : memref<36xf32, #tpu.memory_space<smem>>
    %326 = vector.broadcast %325 : f32 to vector<3x16x16xf32>
    %327 = arith.mulf %326, %253 : vector<3x16x16xf32>
    %328 = arith.addf %324, %327 : vector<3x16x16xf32>
    %c1_72 = arith.constant 1 : index
    %329 = memref.load %arg5[%c1_72] : memref<2xf32, #tpu.memory_space<smem>>
    %330 = vector.broadcast %329 : f32 to vector<3x16x16xf32>
    %331 = arith.addf %7, %330 : vector<3x16x16xf32>
    %c1_73 = arith.constant 1 : index
    %332 = memref.load %arg4[%c1_73] : memref<36xf32, #tpu.memory_space<smem>>
    %333 = vector.broadcast %332 : f32 to vector<3x16x16xf32>
    %334 = arith.mulf %333, %214 : vector<3x16x16xf32>
    %335 = arith.addf %331, %334 : vector<3x16x16xf32>
    %c5_74 = arith.constant 5 : index
    %336 = memref.load %arg4[%c5_74] : memref<36xf32, #tpu.memory_space<smem>>
    %337 = vector.broadcast %336 : f32 to vector<3x16x16xf32>
    %338 = arith.mulf %337, %217 : vector<3x16x16xf32>
    %339 = arith.addf %335, %338 : vector<3x16x16xf32>
    %c9_75 = arith.constant 9 : index
    %340 = memref.load %arg4[%c9_75] : memref<36xf32, #tpu.memory_space<smem>>
    %341 = vector.broadcast %340 : f32 to vector<3x16x16xf32>
    %342 = arith.mulf %341, %220 : vector<3x16x16xf32>
    %343 = arith.addf %339, %342 : vector<3x16x16xf32>
    %c13_76 = arith.constant 13 : index
    %344 = memref.load %arg4[%c13_76] : memref<36xf32, #tpu.memory_space<smem>>
    %345 = vector.broadcast %344 : f32 to vector<3x16x16xf32>
    %346 = arith.mulf %345, %208 : vector<3x16x16xf32>
    %347 = arith.addf %343, %346 : vector<3x16x16xf32>
    %c17_77 = arith.constant 17 : index
    %348 = memref.load %arg4[%c17_77] : memref<36xf32, #tpu.memory_space<smem>>
    %349 = vector.broadcast %348 : f32 to vector<3x16x16xf32>
    %350 = arith.mulf %349, %130 : vector<3x16x16xf32>
    %351 = arith.addf %347, %350 : vector<3x16x16xf32>
    %c21_78 = arith.constant 21 : index
    %352 = memref.load %arg4[%c21_78] : memref<36xf32, #tpu.memory_space<smem>>
    %353 = vector.broadcast %352 : f32 to vector<3x16x16xf32>
    %354 = arith.mulf %353, %211 : vector<3x16x16xf32>
    %355 = arith.addf %351, %354 : vector<3x16x16xf32>
    %c25_79 = arith.constant 25 : index
    %356 = memref.load %arg4[%c25_79] : memref<36xf32, #tpu.memory_space<smem>>
    %357 = vector.broadcast %356 : f32 to vector<3x16x16xf32>
    %358 = arith.mulf %357, %223 : vector<3x16x16xf32>
    %359 = arith.addf %355, %358 : vector<3x16x16xf32>
    %c29_80 = arith.constant 29 : index
    %360 = memref.load %arg4[%c29_80] : memref<36xf32, #tpu.memory_space<smem>>
    %361 = vector.broadcast %360 : f32 to vector<3x16x16xf32>
    %362 = arith.mulf %361, %226 : vector<3x16x16xf32>
    %363 = arith.addf %359, %362 : vector<3x16x16xf32>
    %c33_81 = arith.constant 33 : index
    %364 = memref.load %arg4[%c33_81] : memref<36xf32, #tpu.memory_space<smem>>
    %365 = vector.broadcast %364 : f32 to vector<3x16x16xf32>
    %366 = arith.mulf %365, %229 : vector<3x16x16xf32>
    %367 = arith.addf %363, %366 : vector<3x16x16xf32>
    %c3_82 = arith.constant 3 : index
    %368 = memref.load %arg4[%c3_82] : memref<36xf32, #tpu.memory_space<smem>>
    %369 = vector.broadcast %368 : f32 to vector<3x16x16xf32>
    %370 = arith.mulf %369, %238 : vector<3x16x16xf32>
    %371 = arith.addf %367, %370 : vector<3x16x16xf32>
    %c7_83 = arith.constant 7 : index
    %372 = memref.load %arg4[%c7_83] : memref<36xf32, #tpu.memory_space<smem>>
    %373 = vector.broadcast %372 : f32 to vector<3x16x16xf32>
    %374 = arith.mulf %373, %241 : vector<3x16x16xf32>
    %375 = arith.addf %371, %374 : vector<3x16x16xf32>
    %c11_84 = arith.constant 11 : index
    %376 = memref.load %arg4[%c11_84] : memref<36xf32, #tpu.memory_space<smem>>
    %377 = vector.broadcast %376 : f32 to vector<3x16x16xf32>
    %378 = arith.mulf %377, %244 : vector<3x16x16xf32>
    %379 = arith.addf %375, %378 : vector<3x16x16xf32>
    %c15_85 = arith.constant 15 : index
    %380 = memref.load %arg4[%c15_85] : memref<36xf32, #tpu.memory_space<smem>>
    %381 = vector.broadcast %380 : f32 to vector<3x16x16xf32>
    %382 = arith.mulf %381, %232 : vector<3x16x16xf32>
    %383 = arith.addf %379, %382 : vector<3x16x16xf32>
    %c19_86 = arith.constant 19 : index
    %384 = memref.load %arg4[%c19_86] : memref<36xf32, #tpu.memory_space<smem>>
    %385 = vector.broadcast %384 : f32 to vector<3x16x16xf32>
    %386 = arith.mulf %385, %205 : vector<3x16x16xf32>
    %387 = arith.addf %383, %386 : vector<3x16x16xf32>
    %c23_87 = arith.constant 23 : index
    %388 = memref.load %arg4[%c23_87] : memref<36xf32, #tpu.memory_space<smem>>
    %389 = vector.broadcast %388 : f32 to vector<3x16x16xf32>
    %390 = arith.mulf %389, %235 : vector<3x16x16xf32>
    %391 = arith.addf %387, %390 : vector<3x16x16xf32>
    %c27_88 = arith.constant 27 : index
    %392 = memref.load %arg4[%c27_88] : memref<36xf32, #tpu.memory_space<smem>>
    %393 = vector.broadcast %392 : f32 to vector<3x16x16xf32>
    %394 = arith.mulf %393, %247 : vector<3x16x16xf32>
    %395 = arith.addf %391, %394 : vector<3x16x16xf32>
    %c31_89 = arith.constant 31 : index
    %396 = memref.load %arg4[%c31_89] : memref<36xf32, #tpu.memory_space<smem>>
    %397 = vector.broadcast %396 : f32 to vector<3x16x16xf32>
    %398 = arith.mulf %397, %250 : vector<3x16x16xf32>
    %399 = arith.addf %395, %398 : vector<3x16x16xf32>
    %c35_90 = arith.constant 35 : index
    %400 = memref.load %arg4[%c35_90] : memref<36xf32, #tpu.memory_space<smem>>
    %401 = vector.broadcast %400 : f32 to vector<3x16x16xf32>
    %402 = arith.mulf %401, %253 : vector<3x16x16xf32>
    %403 = arith.addf %399, %402 : vector<3x16x16xf32>
    %c0_91 = arith.constant 0 : index
    %c0_92 = arith.constant 0 : index
    %c0_93 = arith.constant 0 : index
    %c0_94 = arith.constant 0 : index
    %c0_95 = arith.constant 0 : index
    %404 = vector.load %arg7[%c0_91, %c0_92, %c0_93, %c0_94, %c0_95] : memref<1x4x3x16x16xf32, #tpu.memory_space<vmem>>, vector<1x1x3x16x16xf32>
    %405 = vector.shape_cast %404 : vector<1x1x3x16x16xf32> to vector<3x16x16xf32>
    %406 = vector.shape_cast %130 : vector<3x16x16xf32> to vector<1x1x3x16x16xf32>
    tpu.vector_store %arg7[%c0_91, %c0_92, %c0_93, %c0_94, %c0_95], %406 {strides = array<i32>} : memref<1x4x3x16x16xf32, #tpu.memory_space<vmem>>, vector<1x1x3x16x16xf32>,
    %c0_96 = arith.constant 0 : index
    %c2_97 = arith.constant 2 : index
    %c0_98 = arith.constant 0 : index
    %c0_99 = arith.constant 0 : index
    %c0_100 = arith.constant 0 : index
    %407 = vector.load %arg7[%c0_96, %c2_97, %c0_98, %c0_99, %c0_100] : memref<1x4x3x16x16xf32, #tpu.memory_space<vmem>>, vector<1x1x3x16x16xf32>
    %408 = vector.shape_cast %407 : vector<1x1x3x16x16xf32> to vector<3x16x16xf32>
    %409 = vector.shape_cast %328 : vector<3x16x16xf32> to vector<1x1x3x16x16xf32>
    tpu.vector_store %arg7[%c0_96, %c2_97, %c0_98, %c0_99, %c0_100], %409 {strides = array<i32>} : memref<1x4x3x16x16xf32, #tpu.memory_space<vmem>>, vector<1x1x3x16x16xf32>,
    %c0_101 = arith.constant 0 : index
    %c1_102 = arith.constant 1 : index
    %c0_103 = arith.constant 0 : index
    %c0_104 = arith.constant 0 : index
    %c0_105 = arith.constant 0 : index
    %410 = vector.load %arg7[%c0_101, %c1_102, %c0_103, %c0_104, %c0_105] : memref<1x4x3x16x16xf32, #tpu.memory_space<vmem>>, vector<1x1x3x16x16xf32>
    %411 = vector.shape_cast %410 : vector<1x1x3x16x16xf32> to vector<3x16x16xf32>
    %412 = vector.shape_cast %205 : vector<3x16x16xf32> to vector<1x1x3x16x16xf32>
    tpu.vector_store %arg7[%c0_101, %c1_102, %c0_103, %c0_104, %c0_105], %412 {strides = array<i32>} : memref<1x4x3x16x16xf32, #tpu.memory_space<vmem>>, vector<1x1x3x16x16xf32>,
    %c0_106 = arith.constant 0 : index
    %c3_107 = arith.constant 3 : index
    %c0_108 = arith.constant 0 : index
    %c0_109 = arith.constant 0 : index
    %c0_110 = arith.constant 0 : index
    %413 = vector.load %arg7[%c0_106, %c3_107, %c0_108, %c0_109, %c0_110] : memref<1x4x3x16x16xf32, #tpu.memory_space<vmem>>, vector<1x1x3x16x16xf32>
    %414 = vector.shape_cast %413 : vector<1x1x3x16x16xf32> to vector<3x16x16xf32>
    %415 = vector.shape_cast %403 : vector<3x16x16xf32> to vector<1x1x3x16x16xf32>
    tpu.vector_store %arg7[%c0_106, %c3_107, %c0_108, %c0_109, %c0_110], %415 {strides = array<i32>} : memref<1x4x3x16x16xf32, #tpu.memory_space<vmem>>, vector<1x1x3x16x16xf32>,
    return
  }
  func.func @transform_0(%arg0: i32, %arg1: i32) -> i32 {
    %c0_i32 = arith.constant 0 : i32
    %c0_i32_0 = arith.constant 0 : i32
    return %c0_i32 : i32
  }
  func.func @transform_1(%arg0: i32, %arg1: i32) -> i32 {
    %c0_i32 = arith.constant 0 : i32
    %c0_i32_0 = arith.constant 0 : i32
    return %c0_i32 : i32
  }
  func.func @transform_2(%arg0: i32, %arg1: i32) -> i32 {
    %c0_i32 = arith.constant 0 : i32
    %c0_i32_0 = arith.constant 0 : i32
    return %c0_i32 : i32
  }
  func.func @transform_3(%arg0: i32, %arg1: i32) -> i32 {
    %c0_i32 = arith.constant 0 : i32
    %c0_i32_0 = arith.constant 0 : i32
    return %c0_i32 : i32
  }
  func.func @transform_4(%arg0: i32, %arg1: i32) -> (i32, i32, i32, i32, i32) {
    %c0_i32 = arith.constant 0 : i32
    %c0_i32_0 = arith.constant 0 : i32
    %c0_i32_1 = arith.constant 0 : i32
    %c0_i32_2 = arith.constant 0 : i32
    return %arg0, %c0_i32, %arg1, %c0_i32_0, %c0_i32_1 : i32, i32, i32, i32, i32
  }
  func.func @transform_5(%arg0: i32, %arg1: i32) -> (i32, i32, i32, i32, i32) {
    %c0_i32 = arith.constant 0 : i32
    %c0_i32_0 = arith.constant 0 : i32
    %c0_i32_1 = arith.constant 0 : i32
    %c0_i32_2 = arith.constant 0 : i32
    return %arg0, %c0_i32, %arg1, %c0_i32_0, %c0_i32_1 : i32, i32, i32, i32, i32
  }
}

</mosaic_0001>

<llo_original>
// kernel: iconv2dxd_forward.1
$region0: #{iconv2dxd_forward.1}
  #allocation0 [shape = 'u32[]', space=smem, size = 0x4, offset = 0x4, fixed_abs, tag = 'smem constant byte address 0x4 - core index']
  #allocation1 [shape = 'u32[144,128]{1,0:T(1,128)}', space=vmem, size = 0x12000, scoped, tag = 'internal scratch']
  %s0 = inlined_call_operand.vmem [shape: f32[36], index: 0, kind: input, shape index: {}]
  %s1 = inlined_call_operand.hbm [shape: f32[2], index: 1, kind: input, shape index: {}]
  %s2 = inlined_call_operand.vmem [shape: f32[36], index: 2, kind: input, shape index: {}]
  %s3 = inlined_call_operand.vmem [shape: f32[2], index: 3, kind: input, shape index: {}]
  %s4 = inlined_call_operand.hbm [shape: f32[2,4,3,16,16], index: 4, kind: input, shape index: {}]
  %s5 = inlined_call_operand.hbm [shape: f32[2,4,3,16,16], index: 5, kind: output, shape index: {}]
  %s6 = sld [smem:[#allocation0]]
  $region73: #{iconv2dxd_forward.1} parent=0
    _
  %s8 = ssub.s32 1, %s6
  %s9 = scalar_select 0, %s8, %s6
  $region1: #{iconv2dxd_forward.1} parent=0
    #allocation2 [shape = 'u8[512]{0}', space=smem, size = 0x200, scoped, tag = 'input window, operand 0, single buffered']
    #allocation3 [shape = 's32[2]{0}', space=sflag, size = 0x8, scoped, tag = 'scoped memory for iconv2dxd_forward.1']
    #allocation4 [shape = 's32[2]{0}', space=sflag, size = 0x8, scoped, tag = 'scoped memory for iconv2dxd_forward.1']
    #allocation5 [shape = 's32[2]{0}', space=sflag, size = 0x8, scoped, tag = 'scoped memory for iconv2dxd_forward.1']
    #allocation6 [shape = 's32[2]{0}', space=sflag, size = 0x8, scoped, tag = 'scoped memory for iconv2dxd_forward.1']
    #allocation7 [shape = 'u8[512]{0}', space=smem, size = 0x200, scoped, tag = 'input window, operand 1, single buffered']
    #allocation8 [shape = 'u8[512]{0}', space=smem, size = 0x200, scoped, tag = 'input window, operand 2, single buffered']
    #allocation9 [shape = 's32[1]{0}', space=sflag, size = 0x4, scoped, tag = 'scoped memory for iconv2dxd_forward.1']
    #allocation10 [shape = 'u8[512]{0}', space=smem, size = 0x200, scoped, tag = 'input window, operand 3, single buffered']
    #allocation11 [shape = 'u8[196608]{0}', space=vmem, size = 0x30000, scoped, tag = 'input window, operand 4']
    #allocation12 [shape = 'u8[196608]{0}', space=vmem, size = 0x30000, scoped, tag = 'output window, operand 0']
    %10 = vsyncpa [#allocation6], 0
    %11 = vsyncpa [#allocation5], 0
    %12 = vsyncpa [#allocation9], 0
    %13 = vsyncpa [#allocation3], 0
    %s14 = scalar_lea.sflag [#allocation3], 1
    %15 = vsyncpa %s14, 0
    %16 = vsyncpa [#allocation4], 0
    %s17 = scalar_lea.sflag [#allocation4], 1
    %18 = vsyncpa %s17, 0
    loop: start=0, step=1, limit=4
    $region2: #{iconv2dxd_forward.1} parent=1 // loop_pre_header
      _
    $region3: #{iconv2dxd_forward.1} parent=1 // loop_header
      %s20 = sphi 0, %s24
      %p21 = scmp.ge.s32.totalorder %s20, 4
      %s27 = sphi 0, %s39
      %s28 = sphi 0, %s35
      %s29 = sphi 0, %s27
      %s30 = sphi 0, %s28
      %s31 = sphi 0, %s29
      %s32 = sphi 0, %s30
      %s40 = sphi 0, %s40
      %s42 = sphi 0, %s40
      %s43 = sphi 0, %s42
      %s57 = sphi 0, %s43
      %s61 = sphi 0, %s61
      %s63 = sphi 0, %s61
      %s64 = sphi 0, %s63
      %s78 = sphi 0, %s64
      %s82 = sphi 0, %s82
      %s84 = sphi 0, %s82
      %s85 = sphi 0, %s84
      %s99 = sphi 0, %s85
      %s103 = sphi 0, %s103
      %s105 = sphi 0, %s103
      %s106 = sphi 0, %s105
      %s120 = sphi 0, %s106
      %s128 = sphi 0, %s130
      %s131 = sphi 0, %s128
      %s132 = sphi 0, %s131
      %s148 = sphi 0, %s132
      %s156 = sphi 0, %s158
      %s159 = sphi 0, %s156
      %s160 = sphi 0, %s159
      %s176 = sphi 0, %s160
    $region4: #{iconv2dxd_forward.1} parent=1 // loop_header_branch
      %23 = sbr.rel (%p21) target = $region8
    $region5: #{iconv2dxd_forward.1} parent=1 // loop_body
      %s25 = ssub.s32 %s20, 1
      %s26 = ssub.s32 %s20, 2
      %s33 = sadd.s32 1, %s28
      %p34 = scmp.ge.s32.totalorder %s33, 1
      %s35 = scalar_select %p34, 0, %s33
      %s36 = sadd.s32 1, %s27
      %s37 = scalar_select %p34, %s36, %s27
      %p38 = scmp.ge.s32.totalorder %s37, 2
      %s39 = scalar_select %p38, 0, %s37
      %s41 = sadd.s32 %s40, 1
      %p44 = scmp.eq.s32.totalorder %s20, 1
      %p45 = scmp.ne.s32.totalorder %s40, %s42
      %p46 = scmp.eq.s32.totalorder %s20, 0
      %p47 = por %p45, %p46
      %p48 = scmp.ne.s32.totalorder %s40, %s42
      %p49 = scmp.eq.s32.totalorder %s25, 1
      %p50 = por %p48, %p49
      %p51 = scmp.ne.s32.totalorder %s42, %s43
      %p52 = scmp.eq.s32.totalorder %s25, 0
      %p53 = por %p51, %p52
      %p54 = scmp.ne.s32.totalorder %s42, %s43
      %p55 = scmp.eq.s32.totalorder %s26, 1
      %p56 = por %p54, %p55
      %p58 = scmp.ne.s32.totalorder %s43, %s57
      %p59 = scmp.eq.s32.totalorder %s26, 0
      %p60 = por %p58, %p59
      %s62 = sadd.s32 %s61, 1
      %p65 = scmp.eq.s32.totalorder %s20, 1
      %p66 = scmp.ne.s32.totalorder %s61, %s63
      %p67 = scmp.eq.s32.totalorder %s20, 0
      %p68 = por %p66, %p67
      %p69 = scmp.ne.s32.totalorder %s61, %s63
      %p70 = scmp.eq.s32.totalorder %s25, 1
      %p71 = por %p69, %p70
      %p72 = scmp.ne.s32.totalorder %s63, %s64
      %p73 = scmp.eq.s32.totalorder %s25, 0
      %p74 = por %p72, %p73
      %p75 = scmp.ne.s32.totalorder %s63, %s64
      %p76 = scmp.eq.s32.totalorder %s26, 1
      %p77 = por %p75, %p76
      %p79 = scmp.ne.s32.totalorder %s64, %s78
      %p80 = scmp.eq.s32.totalorder %s26, 0
      %p81 = por %p79, %p80
      %s83 = sadd.s32 %s82, 1
      %p86 = scmp.eq.s32.totalorder %s20, 1
      %p87 = scmp.ne.s32.totalorder %s82, %s84
      %p88 = scmp.eq.s32.totalorder %s20, 0
      %p89 = por %p87, %p88
      %p90 = scmp.ne.s32.totalorder %s82, %s84
      %p91 = scmp.eq.s32.totalorder %s25, 1
      %p92 = por %p90, %p91
      %p93 = scmp.ne.s32.totalorder %s84, %s85
      %p94 = scmp.eq.s32.totalorder %s25, 0
      %p95 = por %p93, %p94
      %p96 = scmp.ne.s32.totalorder %s84, %s85
      %p97 = scmp.eq.s32.totalorder %s26, 1
      %p98 = por %p96, %p97
      %p100 = scmp.ne.s32.totalorder %s85, %s99
      %p101 = scmp.eq.s32.totalorder %s26, 0
      %p102 = por %p100, %p101
      %s104 = sadd.s32 %s103, 1
      %p107 = scmp.eq.s32.totalorder %s20, 1
      %p108 = scmp.ne.s32.totalorder %s103, %s105
      %p109 = scmp.eq.s32.totalorder %s20, 0
      %p110 = por %p108, %p109
      %p111 = scmp.ne.s32.totalorder %s103, %s105
      %p112 = scmp.eq.s32.totalorder %s25, 1
      %p113 = por %p111, %p112
      %p114 = scmp.ne.s32.totalorder %s105, %s106
      %p115 = scmp.eq.s32.totalorder %s25, 0
      %p116 = por %p114, %p115
      %p117 = scmp.ne.s32.totalorder %s105, %s106
      %p118 = scmp.eq.s32.totalorder %s26, 1
      %p119 = por %p117, %p118
      %p121 = scmp.ne.s32.totalorder %s106, %s120
      %p122 = scmp.eq.s32.totalorder %s26, 0
      %p123 = por %p121, %p122
      %s124 = ssub.s32 %s27, %s39
      %s125 = ssub.s32 %s28, %s35
      %s126 = sor.u32 %s124, %s125
      %p127 = scmp.eq.s32.totalorder %s126, 0
      %s129 = sadd.s32 %s128, 1
      %s130 = scalar_select %p127, %s128, %s129
      %p133 = pneg %p127
      %p134 = scmp.eq.s32.totalorder %s20, 1
      %p135 = por %p133, %p134
      %p136 = scmp.ne.s32.totalorder %s128, %s131
      %p137 = scmp.eq.s32.totalorder %s20, 0
      %p138 = por %p136, %p137
      %p139 = scmp.ne.s32.totalorder %s128, %s131
      %p140 = scmp.eq.s32.totalorder %s25, 1
      %p141 = por %p139, %p140
      %p142 = scmp.ne.s32.totalorder %s131, %s132
      %p143 = scmp.eq.s32.totalorder %s25, 0
      %p144 = por %p142, %p143
      %p145 = scmp.ne.s32.totalorder %s131, %s132
      %p146 = scmp.eq.s32.totalorder %s26, 1
      %p147 = por %p145, %p146
      %p149 = scmp.ne.s32.totalorder %s132, %s148
      %p150 = scmp.eq.s32.totalorder %s26, 0
      %p151 = por %p149, %p150
      %s152 = ssub.s32 %s27, %s39
      %s153 = ssub.s32 %s28, %s35
      %s154 = sor.u32 %s152, %s153
      %p155 = scmp.eq.s32.totalorder %s154, 0
      %s157 = sadd.s32 %s156, 1
      %s158 = scalar_select %p155, %s156, %s157
      %p161 = pneg %p155
      %p162 = scmp.eq.s32.totalorder %s20, 1
      %p163 = por %p161, %p162
      %p164 = scmp.ne.s32.totalorder %s156, %s159
      %p165 = scmp.eq.s32.totalorder %s20, 0
      %p166 = por %p164, %p165
      %p167 = scmp.ne.s32.totalorder %s156, %s159
      %p168 = scmp.eq.s32.totalorder %s25, 1
      %p169 = por %p167, %p168
      %p170 = scmp.ne.s32.totalorder %s159, %s160
      %p171 = scmp.eq.s32.totalorder %s25, 0
      %p172 = por %p170, %p171
      %p173 = scmp.ne.s32.totalorder %s159, %s160
      %p174 = scmp.eq.s32.totalorder %s26, 1
      %p175 = por %p173, %p174
      %p177 = scmp.ne.s32.totalorder %s160, %s176
      %p178 = scmp.eq.s32.totalorder %s26, 0
      %p179 = por %p177, %p178
      %p180 = scmp.le.s32.totalorder 1, %s20
      %p181 = scmp.lt.s32.totalorder %s20, 3
      %p182 = pnand %p180, %p181
      %p183 = pneg %p182
      // Predicated region
      $region9: #{iconv2dxd_forward.1} parent=5 // pred_check
        _
      $region10: #{iconv2dxd_forward.1} parent=5 // pred_check_branch
        %185 = sbr.rel (%p182) target = $region12
      $region11: #{iconv2dxd_forward.1} parent=5 // pred_region
        %s186 = ssub.s32 %s20, 1
        // Predicated region
        $region13: #{iconv2dxd_forward.1} parent=11 // pred_check
          %p187 = pneg %p53
        $region14: #{iconv2dxd_forward.1} parent=11 // pred_check_branch
          %189 = sbr.rel (%p187) target = $region16
        $region15: #{iconv2dxd_forward.1} parent=11 // pred_region
          %s191 = ssub.s32 16, 16
          %192 = vsyncadd [#allocation6], %s191
          %s194 = sshll.u32 %s0, 4
          %s195 = int_to_ptr.vmem [resolvable:$true] %s194
          %197 = dma.vmem_to_smem %s195, 16, [#allocation2], [#allocation6]
        $region16: #{iconv2dxd_forward.1} parent=11 // pred_fallthru
          _
        // Predicated region
        $region17: #{iconv2dxd_forward.1} parent=11 // pred_check
          %p198 = pneg %p74
        $region18: #{iconv2dxd_forward.1} parent=11 // pred_check_branch
          %200 = sbr.rel (%p198) target = $region20
        $region19: #{iconv2dxd_forward.1} parent=11 // pred_region
          %s202 = ssub.s32 16, 16
          %203 = vsyncadd [#allocation5], %s202
          %206 = dma.hbm_to_smem %s1, 16, [#allocation7], [#allocation5]
        $region20: #{iconv2dxd_forward.1} parent=11 // pred_fallthru
          _
        // Predicated region
        $region21: #{iconv2dxd_forward.1} parent=11 // pred_check
          %p207 = pneg %p95
        $region22: #{iconv2dxd_forward.1} parent=11 // pred_check_branch
          %209 = sbr.rel (%p207) target = $region24
        $region23: #{iconv2dxd_forward.1} parent=11 // pred_region
          %s211 = ssub.s32 16, 16
          %212 = vsyncadd [#allocation9], %s211
          %s214 = sshll.u32 %s2, 4
          %s215 = int_to_ptr.vmem [resolvable:$true] %s214
          %217 = dma.vmem_to_smem %s215, 16, [#allocation8], [#allocation9]
        $region24: #{iconv2dxd_forward.1} parent=11 // pred_fallthru
          _
        // Predicated region
        $region25: #{iconv2dxd_forward.1} parent=11 // pred_check
          %p218 = pneg %p116
        $region26: #{iconv2dxd_forward.1} parent=11 // pred_check_branch
          %220 = sbr.rel (%p218) target = $region28
        $region27: #{iconv2dxd_forward.1} parent=11 // pred_region
          %s222 = ssub.s32 16, 16
          %223 = vsyncadd [#allocation9], %s222
          %s225 = sshll.u32 %s3, 4
          %s226 = int_to_ptr.vmem [resolvable:$true] %s225
          %228 = dma.vmem_to_smem %s226, 16, [#allocation10], [#allocation9]
        $region28: #{iconv2dxd_forward.1} parent=11 // pred_fallthru
          _
      $region12: #{iconv2dxd_forward.1} parent=5 // pred_fallthru
        _
      %p229 = scmp.lt.s32.totalorder %s20, 2
      // Predicated region
      $region29: #{iconv2dxd_forward.1} parent=5 // pred_check
        %p230 = pneg %p229
      $region30: #{iconv2dxd_forward.1} parent=5 // pred_check_branch
        %232 = sbr.rel (%p230) target = $region32
      $region31: #{iconv2dxd_forward.1} parent=5 // pred_region
        // Predicated region
        $region33: #{iconv2dxd_forward.1} parent=31 // pred_check
          %p233 = pneg %p138
        $region34: #{iconv2dxd_forward.1} parent=31 // pred_check_branch
          %235 = sbr.rel (%p233) target = $region36
        $region35: #{iconv2dxd_forward.1} parent=31 // pred_region
          %s236 = sand.u32 %s128, 1
          %s237 = scalar_lea.sflag [#allocation3], %s236
          %s238 = sand.u32 %s128, 1
          %s239 = smul.addr %s238, 192
          %s240 = scalar_lea.vmem [#allocation11], %s239
          %s241 = smul.u32 3, %s28
          %s243 = ssub.s32 3072, 3072
          %244 = vsyncadd %s237, %s243
          %s245 = smul.addr %s241, 2
          %s246 = smul.addr %s27, 24
          %s247 = sadd.s32 %s245, %s246
          %s248 = smul.addr %s247, 128
          %s249 = scalar_lea.hbm %s4, %s248
          %s250 = sshll.u32 %s240, 4
          %s251 = int_to_ptr.vmem [resolvable:$true] %s250
          %256 = dma.hbm_to_vmem [thread:$0]  %s249, 3072, %s251, %s237, 128, 128, 8
        $region36: #{iconv2dxd_forward.1} parent=31 // pred_fallthru
          _
      $region32: #{iconv2dxd_forward.1} parent=5 // pred_fallthru
        _
      %p257 = scmp.le.s32.totalorder 1, %s20
      %p258 = scmp.lt.s32.totalorder %s20, 3
      %p259 = pnand %p257, %p258
      %p260 = pneg %p259
      // Predicated region
      $region37: #{iconv2dxd_forward.1} parent=5 // pred_check
        _
      $region38: #{iconv2dxd_forward.1} parent=5 // pred_check_branch
        %262 = sbr.rel (%p259) target = $region40
      $region39: #{iconv2dxd_forward.1} parent=5 // pred_region
        %s263 = ssub.s32 %s20, 1
        // Predicated region
        $region41: #{iconv2dxd_forward.1} parent=39 // pred_check
          %p264 = pneg %p53
        $region42: #{iconv2dxd_forward.1} parent=39 // pred_check_branch
          %266 = sbr.rel (%p264) target = $region44
        $region43: #{iconv2dxd_forward.1} parent=39 // pred_region
          %267 = dma.done [#allocation6], 16
        $region44: #{iconv2dxd_forward.1} parent=39 // pred_fallthru
          _
        // Predicated region
        $region45: #{iconv2dxd_forward.1} parent=39 // pred_check
          %p268 = pneg %p74
        $region46: #{iconv2dxd_forward.1} parent=39 // pred_check_branch
          %270 = sbr.rel (%p268) target = $region48
        $region47: #{iconv2dxd_forward.1} parent=39 // pred_region
          %271 = dma.done [#allocation5], 16
        $region48: #{iconv2dxd_forward.1} parent=39 // pred_fallthru
          _
        // Predicated region
        $region49: #{iconv2dxd_forward.1} parent=39 // pred_check
          %p272 = pneg %p95
        $region50: #{iconv2dxd_forward.1} parent=39 // pred_check_branch
          %274 = sbr.rel (%p272) target = $region52
        $region51: #{iconv2dxd_forward.1} parent=39 // pred_region
          %275 = dma.done [#allocation9], 16
        $region52: #{iconv2dxd_forward.1} parent=39 // pred_fallthru
          _
        // Predicated region
        $region53: #{iconv2dxd_forward.1} parent=39 // pred_check
          %p276 = pneg %p116
        $region54: #{iconv2dxd_forward.1} parent=39 // pred_check_branch
          %278 = sbr.rel (%p276) target = $region56
        $region55: #{iconv2dxd_forward.1} parent=39 // pred_region
          %279 = dma.done [#allocation9], 16
        $region56: #{iconv2dxd_forward.1} parent=39 // pred_fallthru
          _
        %s280 = sand.u32 %s131, 1
        %s281 = scalar_lea.sflag [#allocation3], %s280
        %s282 = sand.u32 %s131, 1
        %s283 = smul.addr %s282, 192
        %s284 = scalar_lea.vmem [#allocation11], %s283
        // Predicated region
        $region57: #{iconv2dxd_forward.1} parent=39 // pred_check
          %p285 = pneg %p144
        $region58: #{iconv2dxd_forward.1} parent=39 // pred_check_branch
          %287 = sbr.rel (%p285) target = $region60
        $region59: #{iconv2dxd_forward.1} parent=39 // pred_region
          %288 = dma.done %s281, 3072
        $region60: #{iconv2dxd_forward.1} parent=39 // pred_fallthru
          _
        %289 = sfence
        %p290 = pneg %p53
        %p291 = pneg %p50
        %p292 = pneg %p74
        %p293 = pneg %p71
        %p294 = pneg %p95
        %p295 = pneg %p92
        %p296 = pneg %p116
        %p297 = pneg %p113
        %s298 = sand.u32 %s131, 1
        %s299 = scalar_lea.sflag [#allocation3], %s298
        %s300 = sand.u32 %s131, 1
        %s301 = smul.addr %s300, 192
        %s302 = scalar_lea.vmem [#allocation11], %s301
        %p303 = pneg %p144
        %p304 = pneg %p141
        %p305 = pneg %p172
        %p306 = pneg %p169
        %s307 = sand.u32 %s159, 1
        %s308 = scalar_lea.sflag [#allocation4], %s307
        %s309 = sand.u32 %s159, 1
        %s310 = smul.addr %s309, 192
        %s311 = scalar_lea.vmem [#allocation12], %s310
        %s312 = smul.u32 3, %s30
        %s313 = smul.u32 3, %s30
        %v314 = vld [vmem:[%s284] sm:$0xff]
        %v315 = vld [vmem:[%s284 + $0x8] sm:$0xff]
        %v316 = vld [vmem:[%s284 + $0x10] sm:$0xff]
        %v317 = vld [vmem:[%s284 + $0x18] sm:$0xff]
        %v318 = vld [vmem:[%s284 + $0x20] sm:$0xff]
        %v319 = vld [vmem:[%s284 + $0x28] sm:$0xff]
        %s320 = scalar_lea.vmem %s284, 48 [#allocation11]
        %v321 = vld [vmem:[%s320] sm:$0xff]
        %v322 = vld [vmem:[%s320 + $0x8] sm:$0xff]
        %v323 = vld [vmem:[%s320 + $0x10] sm:$0xff]
        %v324 = vld [vmem:[%s320 + $0x18] sm:$0xff]
        %v325 = vld [vmem:[%s320 + $0x20] sm:$0xff]
        %v326 = vld [vmem:[%s320 + $0x28] sm:$0xff]
        %s327 = scalar_lea.vmem %s284, 96 [#allocation11]
        %v328 = vld [vmem:[%s327] sm:$0xff]
        %v329 = vld [vmem:[%s327 + $0x8] sm:$0xff]
        %v330 = vld [vmem:[%s327 + $0x10] sm:$0xff]
        %v331 = vld [vmem:[%s327 + $0x18] sm:$0xff]
        %v332 = vld [vmem:[%s327 + $0x20] sm:$0xff]
        %v333 = vld [vmem:[%s327 + $0x28] sm:$0xff]
        %s334 = scalar_lea.vmem %s284, 144 [#allocation11]
        %v335 = vld [vmem:[%s334] sm:$0xff]
        %v336 = vld [vmem:[%s334 + $0x8] sm:$0xff]
        %v337 = vld [vmem:[%s334 + $0x10] sm:$0xff]
        %v338 = vld [vmem:[%s334 + $0x18] sm:$0xff]
        %v339 = vld [vmem:[%s334 + $0x20] sm:$0xff]
        %v340 = vld [vmem:[%s334 + $0x28] sm:$0xff]
        %347 = vrot.lane.b32.xlu0 %v328, 1
        %v348 = vpop.permute.xlu0 %347
        %349 = vrot.lane.b32.xlu0 %v329, 1
        %v350 = vpop.permute.xlu0 %349
        %351 = vrot.lane.b32.xlu0 %v330, 1
        %v352 = vpop.permute.xlu0 %351
        %353 = vrot.lane.b32.xlu0 %v331, 1
        %v354 = vpop.permute.xlu0 %353
        %355 = vrot.lane.b32.xlu0 %v332, 1
        %v356 = vpop.permute.xlu0 %355
        %357 = vrot.lane.b32.xlu0 %v333, 1
        %v358 = vpop.permute.xlu0 %357
        %vm365 = vcmask 7168
        %v366 = vsel %vm365, 0.0, %v348
        %v367 = vsel %vm365, 0.0, %v350
        %v368 = vsel %vm365, 0.0, %v352
        %v369 = vsel %vm365, 0.0, %v354
        %v370 = vsel %vm365, 0.0, %v356
        %v371 = vsel %vm365, 0.0, %v358
        %372 = vrot.lane.b32.xlu0 %v328, 127
        %v373 = vpop.permute.xlu0 %372
        %374 = vrot.lane.b32.xlu0 %v329, 127
        %v375 = vpop.permute.xlu0 %374
        %376 = vrot.lane.b32.xlu0 %v330, 127
        %v377 = vpop.permute.xlu0 %376
        %378 = vrot.lane.b32.xlu0 %v331, 127
        %v379 = vpop.permute.xlu0 %378
        %380 = vrot.lane.b32.xlu0 %v332, 127
        %v381 = vpop.permute.xlu0 %380
        %382 = vrot.lane.b32.xlu0 %v333, 127
        %v383 = vpop.permute.xlu0 %382
        %vm390 = vcmask 121856
        %v391 = vsel %vm390, %v373, 0.0
        %v392 = vsel %vm390, %v375, 0.0
        %v393 = vsel %vm390, %v377, 0.0
        %v394 = vsel %vm390, %v379, 0.0
        %v395 = vsel %vm390, %v381, 0.0
        %v396 = vsel %vm390, %v383, 0.0
        %vm403 = vcmask 1040384
        %v404 = vrot.slane %v366, 7
        %v405 = vrot.slane %v367, 7
        %v406 = vsel %vm403, %v404, %v405
        %v407 = vrot.slane %v368, 7
        %v408 = vrot.slane %v369, 7
        %v409 = vsel %vm403, %v407, %v408
        %v410 = vrot.slane %v370, 7
        %v411 = vrot.slane %v371, 7
        %v412 = vsel %vm403, %v410, %v411
        %v419 = vsel %vm403, 0.0, %v404
        %v420 = vsel %vm403, 0.0, %v407
        %v421 = vsel %vm403, 0.0, %v410
        %v422 = vrot.slane %v328, 7
        %v423 = vrot.slane %v329, 7
        %v424 = vsel %vm403, %v422, %v423
        %v425 = vrot.slane %v330, 7
        %v426 = vrot.slane %v331, 7
        %v427 = vsel %vm403, %v425, %v426
        %v428 = vrot.slane %v332, 7
        %v429 = vrot.slane %v333, 7
        %v430 = vsel %vm403, %v428, %v429
        %v437 = vsel %vm403, 0.0, %v422
        %v438 = vsel %vm403, 0.0, %v425
        %v439 = vsel %vm403, 0.0, %v428
        %v446 = vrot.slane %v391, 7
        %v447 = vrot.slane %v392, 7
        %v448 = vsel %vm403, %v446, %v447
        %v449 = vrot.slane %v393, 7
        %v450 = vrot.slane %v394, 7
        %v451 = vsel %vm403, %v449, %v450
        %v452 = vrot.slane %v395, 7
        %v453 = vrot.slane %v396, 7
        %v454 = vsel %vm403, %v452, %v453
        %v461 = vsel %vm403, 0.0, %v446
        %v462 = vsel %vm403, 0.0, %v449
        %v463 = vsel %vm403, 0.0, %v452
        %vm464 = vcmask 1046528
        %v465 = vrot.slane %v366, 1
        %v466 = vrot.slane %v367, 1
        %v467 = vsel %vm464, %v465, %v466
        %v468 = vrot.slane %v368, 1
        %v469 = vrot.slane %v369, 1
        %v470 = vsel %vm464, %v468, %v469
        %v471 = vrot.slane %v370, 1
        %v472 = vrot.slane %v371, 1
        %v473 = vsel %vm464, %v471, %v472
        %v480 = vsel %vm464, %v466, 0.0
        %v481 = vsel %vm464, %v469, 0.0
        %v482 = vsel %vm464, %v472, 0.0
        %v483 = vrot.slane %v328, 1
        %v484 = vrot.slane %v329, 1
        %v485 = vsel %vm464, %v483, %v484
        %v486 = vrot.slane %v330, 1
        %v487 = vrot.slane %v331, 1
        %v488 = vsel %vm464, %v486, %v487
        %v489 = vrot.slane %v332, 1
        %v490 = vrot.slane %v333, 1
        %v491 = vsel %vm464, %v489, %v490
        %v498 = vsel %vm464, %v484, 0.0
        %v499 = vsel %vm464, %v487, 0.0
        %v500 = vsel %vm464, %v490, 0.0
        %v501 = vrot.slane %v391, 1
        %v502 = vrot.slane %v392, 1
        %v503 = vsel %vm464, %v501, %v502
        %v504 = vrot.slane %v393, 1
        %v505 = vrot.slane %v394, 1
        %v506 = vsel %vm464, %v504, %v505
        %v507 = vrot.slane %v395, 1
        %v508 = vrot.slane %v396, 1
        %v509 = vsel %vm464, %v507, %v508
        %v516 = vsel %vm464, %v502, 0.0
        %v517 = vsel %vm464, %v505, 0.0
        %v518 = vsel %vm464, %v508, 0.0
        %525 = vrot.lane.b32.xlu0 %v335, 1
        %v526 = vpop.permute.xlu0 %525
        %527 = vrot.lane.b32.xlu0 %v336, 1
        %v528 = vpop.permute.xlu0 %527
        %529 = vrot.lane.b32.xlu0 %v337, 1
        %v530 = vpop.permute.xlu0 %529
        %531 = vrot.lane.b32.xlu0 %v338, 1
        %v532 = vpop.permute.xlu0 %531
        %533 = vrot.lane.b32.xlu0 %v339, 1
        %v534 = vpop.permute.xlu0 %533
        %535 = vrot.lane.b32.xlu0 %v340, 1
        %v536 = vpop.permute.xlu0 %535
        %v543 = vsel %vm365, 0.0, %v526
        %v544 = vsel %vm365, 0.0, %v528
        %v545 = vsel %vm365, 0.0, %v530
        %v546 = vsel %vm365, 0.0, %v532
        %v547 = vsel %vm365, 0.0, %v534
        %v548 = vsel %vm365, 0.0, %v536
        %549 = vrot.lane.b32.xlu0 %v335, 127
        %v550 = vpop.permute.xlu0 %549
        %551 = vrot.lane.b32.xlu0 %v336, 127
        %v552 = vpop.permute.xlu0 %551
        %553 = vrot.lane.b32.xlu0 %v337, 127
        %v554 = vpop.permute.xlu0 %553
        %555 = vrot.lane.b32.xlu0 %v338, 127
        %v556 = vpop.permute.xlu0 %555
        %557 = vrot.lane.b32.xlu0 %v339, 127
        %v558 = vpop.permute.xlu0 %557
        %559 = vrot.lane.b32.xlu0 %v340, 127
        %v560 = vpop.permute.xlu0 %559
        %v567 = vsel %vm390, %v550, 0.0
        %v568 = vsel %vm390, %v552, 0.0
        %v569 = vsel %vm390, %v554, 0.0
        %v570 = vsel %vm390, %v556, 0.0
        %v571 = vsel %vm390, %v558, 0.0
        %v572 = vsel %vm390, %v560, 0.0
        %v579 = vrot.slane %v543, 7
        %v580 = vrot.slane %v544, 7
        %v581 = vsel %vm403, %v579, %v580
        %v582 = vrot.slane %v545, 7
        %v583 = vrot.slane %v546, 7
        %v584 = vsel %vm403, %v582, %v583
        %v585 = vrot.slane %v547, 7
        %v586 = vrot.slane %v548, 7
        %v587 = vsel %vm403, %v585, %v586
        %v594 = vsel %vm403, 0.0, %v579
        %v595 = vsel %vm403, 0.0, %v582
        %v596 = vsel %vm403, 0.0, %v585
        %v597 = vrot.slane %v335, 7
        %v598 = vrot.slane %v336, 7
        %v599 = vsel %vm403, %v597, %v598
        %v600 = vrot.slane %v337, 7
        %v601 = vrot.slane %v338, 7
        %v602 = vsel %vm403, %v600, %v601
        %v603 = vrot.slane %v339, 7
        %v604 = vrot.slane %v340, 7
        %v605 = vsel %vm403, %v603, %v604
        %v612 = vsel %vm403, 0.0, %v597
        %v613 = vsel %vm403, 0.0, %v600
        %v614 = vsel %vm403, 0.0, %v603
        %v621 = vrot.slane %v567, 7
        %v622 = vrot.slane %v568, 7
        %v623 = vsel %vm403, %v621, %v622
        %v624 = vrot.slane %v569, 7
        %v625 = vrot.slane %v570, 7
        %v626 = vsel %vm403, %v624, %v625
        %v627 = vrot.slane %v571, 7
        %v628 = vrot.slane %v572, 7
        %v629 = vsel %vm403, %v627, %v628
        %v636 = vsel %vm403, 0.0, %v621
        %v637 = vsel %vm403, 0.0, %v624
        %v638 = vsel %vm403, 0.0, %v627
        %v639 = vrot.slane %v543, 1
        %v640 = vrot.slane %v544, 1
        %v641 = vsel %vm464, %v639, %v640
        %v642 = vrot.slane %v545, 1
        %v643 = vrot.slane %v546, 1
        %v644 = vsel %vm464, %v642, %v643
        %v645 = vrot.slane %v547, 1
        %v646 = vrot.slane %v548, 1
        %v647 = vsel %vm464, %v645, %v646
        %v654 = vsel %vm464, %v640, 0.0
        %v655 = vsel %vm464, %v643, 0.0
        %v656 = vsel %vm464, %v646, 0.0
        %v657 = vrot.slane %v335, 1
        %v658 = vrot.slane %v336, 1
        %v659 = vsel %vm464, %v657, %v658
        %v660 = vrot.slane %v337, 1
        %v661 = vrot.slane %v338, 1
        %v662 = vsel %vm464, %v660, %v661
        %v663 = vrot.slane %v339, 1
        %v664 = vrot.slane %v340, 1
        %v665 = vsel %vm464, %v663, %v664
        %v672 = vsel %vm464, %v658, 0.0
        %v673 = vsel %vm464, %v661, 0.0
        %v674 = vsel %vm464, %v664, 0.0
        %v675 = vrot.slane %v567, 1
        %v676 = vrot.slane %v568, 1
        %v677 = vsel %vm464, %v675, %v676
        %v678 = vrot.slane %v569, 1
        %v679 = vrot.slane %v570, 1
        %v680 = vsel %vm464, %v678, %v679
        %v681 = vrot.slane %v571, 1
        %v682 = vrot.slane %v572, 1
        %v683 = vsel %vm464, %v681, %v682
        %v690 = vsel %vm464, %v676, 0.0
        %v691 = vsel %vm464, %v679, 0.0
        %v692 = vsel %vm464, %v682, 0.0
        %s693 = sld [smem:[#allocation7]]
        %v694 = vstv %s693
        %v695 = vadd.f32 %v314, %v694
        %v696 = vadd.f32 %v315, %v694
        %v697 = vadd.f32 %v316, %v694
        %v698 = vadd.f32 %v317, %v694
        %v699 = vadd.f32 %v318, %v694
        %v700 = vadd.f32 %v319, %v694
        %s701 = sld [smem:[#allocation2]]
        %v702 = vstv %s701
        %v703 = vmul.f32 %v702, %v419
        %v704 = vmul.f32 %v702, %v406
        %v705 = vmul.f32 %v702, %v420
        %v706 = vmul.f32 %v702, %v409
        %v707 = vmul.f32 %v702, %v421
        %v708 = vmul.f32 %v702, %v412
        %v709 = vadd.f32 %v695, %v703
        %v710 = vadd.f32 %v696, %v704
        %v711 = vadd.f32 %v697, %v705
        %v712 = vadd.f32 %v698, %v706
        %v713 = vadd.f32 %v699, %v707
        %v714 = vadd.f32 %v700, %v708
        %s715 = sld [smem:[#allocation2 + $0x4]]
        %v716 = vstv %s715
        %v717 = vmul.f32 %v716, %v437
        %v718 = vmul.f32 %v716, %v424
        %v719 = vmul.f32 %v716, %v438
        %v720 = vmul.f32 %v716, %v427
        %v721 = vmul.f32 %v716, %v439
        %v722 = vmul.f32 %v716, %v430
        %v723 = vadd.f32 %v709, %v717
        %v724 = vadd.f32 %v710, %v718
        %v725 = vadd.f32 %v711, %v719
        %v726 = vadd.f32 %v712, %v720
        %v727 = vadd.f32 %v713, %v721
        %v728 = vadd.f32 %v714, %v722
        %s729 = sld [smem:[#allocation2 + $0x8]]
        %v730 = vstv %s729
        %v731 = vmul.f32 %v730, %v461
        %v732 = vmul.f32 %v730, %v448
        %v733 = vmul.f32 %v730, %v462
        %v734 = vmul.f32 %v730, %v451
        %v735 = vmul.f32 %v730, %v463
        %v736 = vmul.f32 %v730, %v454
        %v737 = vadd.f32 %v723, %v731
        %v738 = vadd.f32 %v724, %v732
        %v739 = vadd.f32 %v725, %v733
        %v740 = vadd.f32 %v726, %v734
        %v741 = vadd.f32 %v727, %v735
        %v742 = vadd.f32 %v728, %v736
        %s743 = sld [smem:[#allocation2 + $0xc]]
        %v744 = vstv %s743
        %v745 = vmul.f32 %v744, %v366
        %v746 = vmul.f32 %v744, %v367
        %v747 = vmul.f32 %v744, %v368
        %v748 = vmul.f32 %v744, %v369
        %v749 = vmul.f32 %v744, %v370
        %v750 = vmul.f32 %v744, %v371
        %v751 = vadd.f32 %v737, %v745
        %v752 = vadd.f32 %v738, %v746
        %v753 = vadd.f32 %v739, %v747
        %v754 = vadd.f32 %v740, %v748
        %v755 = vadd.f32 %v741, %v749
        %v756 = vadd.f32 %v742, %v750
        %s757 = sld [smem:[#allocation2 + $0x10]]
        %v758 = vstv %s757
        %v759 = vmul.f32 %v758, %v328
        %v760 = vmul.f32 %v758, %v329
        %v761 = vmul.f32 %v758, %v330
        %v762 = vmul.f32 %v758, %v331
        %v763 = vmul.f32 %v758, %v332
        %v764 = vmul.f32 %v758, %v333
        %v765 = vadd.f32 %v751, %v759
        %v766 = vadd.f32 %v752, %v760
        %v767 = vadd.f32 %v753, %v761
        %v768 = vadd.f32 %v754, %v762
        %v769 = vadd.f32 %v755, %v763
        %v770 = vadd.f32 %v756, %v764
        %s771 = sld [smem:[#allocation2 + $0x14]]
        %v772 = vstv %s771
        %v773 = vmul.f32 %v772, %v391
        %v774 = vmul.f32 %v772, %v392
        %v775 = vmul.f32 %v772, %v393
        %v776 = vmul.f32 %v772, %v394
        %v777 = vmul.f32 %v772, %v395
        %v778 = vmul.f32 %v772, %v396
        %v779 = vadd.f32 %v765, %v773
        %v780 = vadd.f32 %v766, %v774
        %v781 = vadd.f32 %v767, %v775
        %v782 = vadd.f32 %v768, %v776
        %v783 = vadd.f32 %v769, %v777
        %v784 = vadd.f32 %v770, %v778
        %s785 = sld [smem:[#allocation2 + $0x18]]
        %v786 = vstv %s785
        %v787 = vmul.f32 %v786, %v467
        %v788 = vmul.f32 %v786, %v480
        %v789 = vmul.f32 %v786, %v470
        %v790 = vmul.f32 %v786, %v481
        %v791 = vmul.f32 %v786, %v473
        %v792 = vmul.f32 %v786, %v482
        %v793 = vadd.f32 %v779, %v787
        %v794 = vadd.f32 %v780, %v788
        %v795 = vadd.f32 %v781, %v789
        %v796 = vadd.f32 %v782, %v790
        %v797 = vadd.f32 %v783, %v791
        %v798 = vadd.f32 %v784, %v792
        %s799 = sld [smem:[#allocation2 + $0x1c]]
        %v800 = vstv %s799
        %v801 = vmul.f32 %v800, %v485
        %v802 = vmul.f32 %v800, %v498
        %v803 = vmul.f32 %v800, %v488
        %v804 = vmul.f32 %v800, %v499
        %v805 = vmul.f32 %v800, %v491
        %v806 = vmul.f32 %v800, %v500
        %v807 = vadd.f32 %v793, %v801
        %v808 = vadd.f32 %v794, %v802
        %v809 = vadd.f32 %v795, %v803
        %v810 = vadd.f32 %v796, %v804
        %v811 = vadd.f32 %v797, %v805
        %v812 = vadd.f32 %v798, %v806
        %s813 = sld [smem:[#allocation2 + $0x20]]
        %v814 = vstv %s813
        %v815 = vmul.f32 %v814, %v503
        %v816 = vmul.f32 %v814, %v516
        %v817 = vmul.f32 %v814, %v506
        %v818 = vmul.f32 %v814, %v517
        %v819 = vmul.f32 %v814, %v509
        %v820 = vmul.f32 %v814, %v518
        %v821 = vadd.f32 %v807, %v815
        %v822 = vadd.f32 %v808, %v816
        %v823 = vadd.f32 %v809, %v817
        %v824 = vadd.f32 %v810, %v818
        %v825 = vadd.f32 %v811, %v819
        %v826 = vadd.f32 %v812, %v820
        %s827 = sld [smem:[#allocation2 + $0x2]]
        %v828 = vstv %s827
        %v829 = vmul.f32 %v828, %v594
        %v830 = vmul.f32 %v828, %v581
        %v831 = vmul.f32 %v828, %v595
        %v832 = vmul.f32 %v828, %v584
        %v833 = vmul.f32 %v828, %v596
        %v834 = vmul.f32 %v828, %v587
        %v835 = vadd.f32 %v821, %v829
        %v836 = vadd.f32 %v822, %v830
        %v837 = vadd.f32 %v823, %v831
        %v838 = vadd.f32 %v824, %v832
        %v839 = vadd.f32 %v825, %v833
        %v840 = vadd.f32 %v826, %v834
        %s841 = sld [smem:[#allocation2 + $0x6]]
        %v842 = vstv %s841
        %v843 = vmul.f32 %v842, %v612
        %v844 = vmul.f32 %v842, %v599
        %v845 = vmul.f32 %v842, %v613
        %v846 = vmul.f32 %v842, %v602
        %v847 = vmul.f32 %v842, %v614
        %v848 = vmul.f32 %v842, %v605
        %v849 = vadd.f32 %v835, %v843
        %v850 = vadd.f32 %v836, %v844
        %v851 = vadd.f32 %v837, %v845
        %v852 = vadd.f32 %v838, %v846
        %v853 = vadd.f32 %v839, %v847
        %v854 = vadd.f32 %v840, %v848
        %s855 = sld [smem:[#allocation2 + $0xa]]
        %v856 = vstv %s855
        %v857 = vmul.f32 %v856, %v636
        %v858 = vmul.f32 %v856, %v623
        %v859 = vmul.f32 %v856, %v637
        %v860 = vmul.f32 %v856, %v626
        %v861 = vmul.f32 %v856, %v638
        %v862 = vmul.f32 %v856, %v629
        %v863 = vadd.f32 %v849, %v857
        %v864 = vadd.f32 %v850, %v858
        %v865 = vadd.f32 %v851, %v859
        %v866 = vadd.f32 %v852, %v860
        %v867 = vadd.f32 %v853, %v861
        %v868 = vadd.f32 %v854, %v862
        %s869 = sld [smem:[#allocation2 + $0xe]]
        %v870 = vstv %s869
        %v871 = vmul.f32 %v870, %v543
        %v872 = vmul.f32 %v870, %v544
        %v873 = vmul.f32 %v870, %v545
        %v874 = vmul.f32 %v870, %v546
        %v875 = vmul.f32 %v870, %v547
        %v876 = vmul.f32 %v870, %v548
        %v877 = vadd.f32 %v863, %v871
        %v878 = vadd.f32 %v864, %v872
        %v879 = vadd.f32 %v865, %v873
        %v880 = vadd.f32 %v866, %v874
        %v881 = vadd.f32 %v867, %v875
        %v882 = vadd.f32 %v868, %v876
        %s883 = sld [smem:[#allocation2 + $0x12]]
        %v884 = vstv %s883
        %v885 = vmul.f32 %v884, %v335
        %v886 = vmul.f32 %v884, %v336
        %v887 = vmul.f32 %v884, %v337
        %v888 = vmul.f32 %v884, %v338
        %v889 = vmul.f32 %v884, %v339
        %v890 = vmul.f32 %v884, %v340
        %v891 = vadd.f32 %v877, %v885
        %v892 = vadd.f32 %v878, %v886
        %v893 = vadd.f32 %v879, %v887
        %v894 = vadd.f32 %v880, %v888
        %v895 = vadd.f32 %v881, %v889
        %v896 = vadd.f32 %v882, %v890
        %s897 = sld [smem:[#allocation2 + $0x16]]
        %v898 = vstv %s897
        %v899 = vmul.f32 %v898, %v567
        %v900 = vmul.f32 %v898, %v568
        %v901 = vmul.f32 %v898, %v569
        %v902 = vmul.f32 %v898, %v570
        %v903 = vmul.f32 %v898, %v571
        %v904 = vmul.f32 %v898, %v572
        %v905 = vadd.f32 %v891, %v899
        %v906 = vadd.f32 %v892, %v900
        %v907 = vadd.f32 %v893, %v901
        %v908 = vadd.f32 %v894, %v902
        %v909 = vadd.f32 %v895, %v903
        %v910 = vadd.f32 %v896, %v904
        %s911 = sld [smem:[#allocation2 + $0x1a]]
        %v912 = vstv %s911
        %v913 = vmul.f32 %v912, %v641
        %v914 = vmul.f32 %v912, %v654
        %v915 = vmul.f32 %v912, %v644
        %v916 = vmul.f32 %v912, %v655
        %v917 = vmul.f32 %v912, %v647
        %v918 = vmul.f32 %v912, %v656
        %v919 = vadd.f32 %v905, %v913
        %v920 = vadd.f32 %v906, %v914
        %v921 = vadd.f32 %v907, %v915
        %v922 = vadd.f32 %v908, %v916
        %v923 = vadd.f32 %v909, %v917
        %v924 = vadd.f32 %v910, %v918
        %s925 = sld [smem:[#allocation2 + $0x1e]]
        %v926 = vstv %s925
        %v927 = vmul.f32 %v926, %v659
        %v928 = vmul.f32 %v926, %v672
        %v929 = vmul.f32 %v926, %v662
        %v930 = vmul.f32 %v926, %v673
        %v931 = vmul.f32 %v926, %v665
        %v932 = vmul.f32 %v926, %v674
        %v933 = vadd.f32 %v919, %v927
        %v934 = vadd.f32 %v920, %v928
        %v935 = vadd.f32 %v921, %v929
        %v936 = vadd.f32 %v922, %v930
        %v937 = vadd.f32 %v923, %v931
        %v938 = vadd.f32 %v924, %v932
        %s939 = sld [smem:[#allocation2 + $0x22]]
        %v940 = vstv %s939
        %v941 = vmul.f32 %v940, %v677
        %v942 = vmul.f32 %v940, %v690
        %v943 = vmul.f32 %v940, %v680
        %v944 = vmul.f32 %v940, %v691
        %v945 = vmul.f32 %v940, %v683
        %v946 = vmul.f32 %v940, %v692
        %v947 = vadd.f32 %v933, %v941
        %v948 = vadd.f32 %v934, %v942
        %v949 = vadd.f32 %v935, %v943
        %v950 = vadd.f32 %v936, %v944
        %v951 = vadd.f32 %v937, %v945
        %v952 = vadd.f32 %v938, %v946
        %s953 = sld [smem:[#allocation7 + $0x1]]
        %v954 = vstv %s953
        %v955 = vadd.f32 %v321, %v954
        %v956 = vadd.f32 %v322, %v954
        %v957 = vadd.f32 %v323, %v954
        %v958 = vadd.f32 %v324, %v954
        %v959 = vadd.f32 %v325, %v954
        %v960 = vadd.f32 %v326, %v954
        %s961 = sld [smem:[#allocation2 + $0x1]]
        %v962 = vstv %s961
        %v963 = vmul.f32 %v962, %v419
        %v964 = vmul.f32 %v962, %v406
        %v965 = vmul.f32 %v962, %v420
        %v966 = vmul.f32 %v962, %v409
        %v967 = vmul.f32 %v962, %v421
        %v968 = vmul.f32 %v962, %v412
        %v969 = vadd.f32 %v955, %v963
        %v970 = vadd.f32 %v956, %v964
        %v971 = vadd.f32 %v957, %v965
        %v972 = vadd.f32 %v958, %v966
        %v973 = vadd.f32 %v959, %v967
        %v974 = vadd.f32 %v960, %v968
        %s975 = sld [smem:[#allocation2 + $0x5]]
        %v976 = vstv %s975
        %v977 = vmul.f32 %v976, %v437
        %v978 = vmul.f32 %v976, %v424
        %v979 = vmul.f32 %v976, %v438
        %v980 = vmul.f32 %v976, %v427
        %v981 = vmul.f32 %v976, %v439
        %v982 = vmul.f32 %v976, %v430
        %v983 = vadd.f32 %v969, %v977
        %v984 = vadd.f32 %v970, %v978
        %v985 = vadd.f32 %v971, %v979
        %v986 = vadd.f32 %v972, %v980
        %v987 = vadd.f32 %v973, %v981
        %v988 = vadd.f32 %v974, %v982
        %s989 = sld [smem:[#allocation2 + $0x9]]
        %v990 = vstv %s989
        %v991 = vmul.f32 %v990, %v461
        %v992 = vmul.f32 %v990, %v448
        %v993 = vmul.f32 %v990, %v462
        %v994 = vmul.f32 %v990, %v451
        %v995 = vmul.f32 %v990, %v463
        %v996 = vmul.f32 %v990, %v454
        %v997 = vadd.f32 %v983, %v991
        %v998 = vadd.f32 %v984, %v992
        %v999 = vadd.f32 %v985, %v993
        %v1000 = vadd.f32 %v986, %v994
        %v1001 = vadd.f32 %v987, %v995
        %v1002 = vadd.f32 %v988, %v996
        %s1003 = sld [smem:[#allocation2 + $0xd]]
        %v1004 = vstv %s1003
        %v1005 = vmul.f32 %v1004, %v366
        %v1006 = vmul.f32 %v1004, %v367
        %v1007 = vmul.f32 %v1004, %v368
        %v1008 = vmul.f32 %v1004, %v369
        %v1009 = vmul.f32 %v1004, %v370
        %v1010 = vmul.f32 %v1004, %v371
        %v1011 = vadd.f32 %v997, %v1005
        %v1012 = vadd.f32 %v998, %v1006
        %v1013 = vadd.f32 %v999, %v1007
        %v1014 = vadd.f32 %v1000, %v1008
        %v1015 = vadd.f32 %v1001, %v1009
        %v1016 = vadd.f32 %v1002, %v1010
        %s1017 = sld [smem:[#allocation2 + $0x11]]
        %v1018 = vstv %s1017
        %v1019 = vmul.f32 %v1018, %v328
        %v1020 = vmul.f32 %v1018, %v329
        %v1021 = vmul.f32 %v1018, %v330
        %v1022 = vmul.f32 %v1018, %v331
        %v1023 = vmul.f32 %v1018, %v332
        %v1024 = vmul.f32 %v1018, %v333
        %v1025 = vadd.f32 %v1011, %v1019
        %v1026 = vadd.f32 %v1012, %v1020
        %v1027 = vadd.f32 %v1013, %v1021
        %v1028 = vadd.f32 %v1014, %v1022
        %v1029 = vadd.f32 %v1015, %v1023
        %v1030 = vadd.f32 %v1016, %v1024
        %s1031 = sld [smem:[#allocation2 + $0x15]]
        %v1032 = vstv %s1031
        %v1033 = vmul.f32 %v1032, %v391
        %v1034 = vmul.f32 %v1032, %v392
        %v1035 = vmul.f32 %v1032, %v393
        %v1036 = vmul.f32 %v1032, %v394
        %v1037 = vmul.f32 %v1032, %v395
        %v1038 = vmul.f32 %v1032, %v396
        %v1039 = vadd.f32 %v1025, %v1033
        %v1040 = vadd.f32 %v1026, %v1034
        %v1041 = vadd.f32 %v1027, %v1035
        %v1042 = vadd.f32 %v1028, %v1036
        %v1043 = vadd.f32 %v1029, %v1037
        %v1044 = vadd.f32 %v1030, %v1038
        %s1045 = sld [smem:[#allocation2 + $0x19]]
        %v1046 = vstv %s1045
        %v1047 = vmul.f32 %v1046, %v467
        %v1048 = vmul.f32 %v1046, %v480
        %v1049 = vmul.f32 %v1046, %v470
        %v1050 = vmul.f32 %v1046, %v481
        %v1051 = vmul.f32 %v1046, %v473
        %v1052 = vmul.f32 %v1046, %v482
        %v1053 = vadd.f32 %v1039, %v1047
        %v1054 = vadd.f32 %v1040, %v1048
        %v1055 = vadd.f32 %v1041, %v1049
        %v1056 = vadd.f32 %v1042, %v1050
        %v1057 = vadd.f32 %v1043, %v1051
        %v1058 = vadd.f32 %v1044, %v1052
        %s1059 = sld [smem:[#allocation2 + $0x1d]]
        %v1060 = vstv %s1059
        %v1061 = vmul.f32 %v1060, %v485
        %v1062 = vmul.f32 %v1060, %v498
        %v1063 = vmul.f32 %v1060, %v488
        %v1064 = vmul.f32 %v1060, %v499
        %v1065 = vmul.f32 %v1060, %v491
        %v1066 = vmul.f32 %v1060, %v500
        %v1067 = vadd.f32 %v1053, %v1061
        %v1068 = vadd.f32 %v1054, %v1062
        %v1069 = vadd.f32 %v1055, %v1063
        %v1070 = vadd.f32 %v1056, %v1064
        %v1071 = vadd.f32 %v1057, %v1065
        %v1072 = vadd.f32 %v1058, %v1066
        %s1073 = sld [smem:[#allocation2 + $0x21]]
        %v1074 = vstv %s1073
        %v1075 = vmul.f32 %v1074, %v503
        %v1076 = vmul.f32 %v1074, %v516
        %v1077 = vmul.f32 %v1074, %v506
        %v1078 = vmul.f32 %v1074, %v517
        %v1079 = vmul.f32 %v1074, %v509
        %v1080 = vmul.f32 %v1074, %v518
        %v1081 = vadd.f32 %v1067, %v1075
        %v1082 = vadd.f32 %v1068, %v1076
        %v1083 = vadd.f32 %v1069, %v1077
        %v1084 = vadd.f32 %v1070, %v1078
        %v1085 = vadd.f32 %v1071, %v1079
        %v1086 = vadd.f32 %v1072, %v1080
        %s1087 = sld [smem:[#allocation2 + $0x3]]
        %v1088 = vstv %s1087
        %v1089 = vmul.f32 %v1088, %v594
        %v1090 = vmul.f32 %v1088, %v581
        %v1091 = vmul.f32 %v1088, %v595
        %v1092 = vmul.f32 %v1088, %v584
        %v1093 = vmul.f32 %v1088, %v596
        %v1094 = vmul.f32 %v1088, %v587
        %v1095 = vadd.f32 %v1081, %v1089
        %v1096 = vadd.f32 %v1082, %v1090
        %v1097 = vadd.f32 %v1083, %v1091
        %v1098 = vadd.f32 %v1084, %v1092
        %v1099 = vadd.f32 %v1085, %v1093
        %v1100 = vadd.f32 %v1086, %v1094
        %s1101 = sld [smem:[#allocation2 + $0x7]]
        %v1102 = vstv %s1101
        %v1103 = vmul.f32 %v1102, %v612
        %v1104 = vmul.f32 %v1102, %v599
        %v1105 = vmul.f32 %v1102, %v613
        %v1106 = vmul.f32 %v1102, %v602
        %v1107 = vmul.f32 %v1102, %v614
        %v1108 = vmul.f32 %v1102, %v605
        %v1109 = vadd.f32 %v1095, %v1103
        %v1110 = vadd.f32 %v1096, %v1104
        %v1111 = vadd.f32 %v1097, %v1105
        %v1112 = vadd.f32 %v1098, %v1106
        %v1113 = vadd.f32 %v1099, %v1107
        %v1114 = vadd.f32 %v1100, %v1108
        %s1115 = sld [smem:[#allocation2 + $0xb]]
        %v1116 = vstv %s1115
        %v1117 = vmul.f32 %v1116, %v636
        %v1118 = vmul.f32 %v1116, %v623
        %v1119 = vmul.f32 %v1116, %v637
        %v1120 = vmul.f32 %v1116, %v626
        %v1121 = vmul.f32 %v1116, %v638
        %v1122 = vmul.f32 %v1116, %v629
        %v1123 = vadd.f32 %v1109, %v1117
        %v1124 = vadd.f32 %v1110, %v1118
        %v1125 = vadd.f32 %v1111, %v1119
        %v1126 = vadd.f32 %v1112, %v1120
        %v1127 = vadd.f32 %v1113, %v1121
        %v1128 = vadd.f32 %v1114, %v1122
        %s1129 = sld [smem:[#allocation2 + $0xf]]
        %v1130 = vstv %s1129
        %v1131 = vmul.f32 %v1130, %v543
        %v1132 = vmul.f32 %v1130, %v544
        %v1133 = vmul.f32 %v1130, %v545
        %v1134 = vmul.f32 %v1130, %v546
        %v1135 = vmul.f32 %v1130, %v547
        %v1136 = vmul.f32 %v1130, %v548
        %v1137 = vadd.f32 %v1123, %v1131
        %v1138 = vadd.f32 %v1124, %v1132
        %v1139 = vadd.f32 %v1125, %v1133
        %v1140 = vadd.f32 %v1126, %v1134
        %v1141 = vadd.f32 %v1127, %v1135
        %v1142 = vadd.f32 %v1128, %v1136
        %s1143 = sld [smem:[#allocation2 + $0x13]]
        %v1144 = vstv %s1143
        %v1145 = vmul.f32 %v1144, %v335
        %v1146 = vmul.f32 %v1144, %v336
        %v1147 = vmul.f32 %v1144, %v337
        %v1148 = vmul.f32 %v1144, %v338
        %v1149 = vmul.f32 %v1144, %v339
        %v1150 = vmul.f32 %v1144, %v340
        %v1151 = vadd.f32 %v1137, %v1145
        %v1152 = vadd.f32 %v1138, %v1146
        %v1153 = vadd.f32 %v1139, %v1147
        %v1154 = vadd.f32 %v1140, %v1148
        %v1155 = vadd.f32 %v1141, %v1149
        %v1156 = vadd.f32 %v1142, %v1150
        %s1157 = sld [smem:[#allocation2 + $0x17]]
        %v1158 = vstv %s1157
        %v1159 = vmul.f32 %v1158, %v567
        %v1160 = vmul.f32 %v1158, %v568
        %v1161 = vmul.f32 %v1158, %v569
        %v1162 = vmul.f32 %v1158, %v570
        %v1163 = vmul.f32 %v1158, %v571
        %v1164 = vmul.f32 %v1158, %v572
        %v1165 = vadd.f32 %v1151, %v1159
        %v1166 = vadd.f32 %v1152, %v1160
        %v1167 = vadd.f32 %v1153, %v1161
        %v1168 = vadd.f32 %v1154, %v1162
        %v1169 = vadd.f32 %v1155, %v1163
        %v1170 = vadd.f32 %v1156, %v1164
        %s1171 = sld [smem:[#allocation2 + $0x1b]]
        %v1172 = vstv %s1171
        %v1173 = vmul.f32 %v1172, %v641
        %v1174 = vmul.f32 %v1172, %v654
        %v1175 = vmul.f32 %v1172, %v644
        %v1176 = vmul.f32 %v1172, %v655
        %v1177 = vmul.f32 %v1172, %v647
        %v1178 = vmul.f32 %v1172, %v656
        %v1179 = vadd.f32 %v1165, %v1173
        %v1180 = vadd.f32 %v1166, %v1174
        %v1181 = vadd.f32 %v1167, %v1175
        %v1182 = vadd.f32 %v1168, %v1176
        %v1183 = vadd.f32 %v1169, %v1177
        %v1184 = vadd.f32 %v1170, %v1178
        %s1185 = sld [smem:[#allocation2 + $0x1f]]
        %v1186 = vstv %s1185
        %v1187 = vmul.f32 %v1186, %v659
        %v1188 = vmul.f32 %v1186, %v672
        %v1189 = vmul.f32 %v1186, %v662
        %v1190 = vmul.f32 %v1186, %v673
        %v1191 = vmul.f32 %v1186, %v665
        %v1192 = vmul.f32 %v1186, %v674
        %v1193 = vadd.f32 %v1179, %v1187
        %v1194 = vadd.f32 %v1180, %v1188
        %v1195 = vadd.f32 %v1181, %v1189
        %v1196 = vadd.f32 %v1182, %v1190
        %v1197 = vadd.f32 %v1183, %v1191
        %v1198 = vadd.f32 %v1184, %v1192
        %s1199 = sld [smem:[#allocation2 + $0x23]]
        %v1200 = vstv %s1199
        %v1201 = vmul.f32 %v1200, %v677
        %v1202 = vmul.f32 %v1200, %v690
        %v1203 = vmul.f32 %v1200, %v680
        %v1204 = vmul.f32 %v1200, %v691
        %v1205 = vmul.f32 %v1200, %v683
        %v1206 = vmul.f32 %v1200, %v692
        %v1207 = vadd.f32 %v1193, %v1201
        %v1208 = vadd.f32 %v1194, %v1202
        %v1209 = vadd.f32 %v1195, %v1203
        %v1210 = vadd.f32 %v1196, %v1204
        %v1211 = vadd.f32 %v1197, %v1205
        %v1212 = vadd.f32 %v1198, %v1206
        %1219 = vrot.lane.b32.xlu0 %v947, 1
        %v1220 = vpop.permute.xlu0 %1219
        %1221 = vrot.lane.b32.xlu0 %v948, 1
        %v1222 = vpop.permute.xlu0 %1221
        %1223 = vrot.lane.b32.xlu0 %v949, 1
        %v1224 = vpop.permute.xlu0 %1223
        %1225 = vrot.lane.b32.xlu0 %v950, 1
        %v1226 = vpop.permute.xlu0 %1225
        %1227 = vrot.lane.b32.xlu0 %v951, 1
        %v1228 = vpop.permute.xlu0 %1227
        %1229 = vrot.lane.b32.xlu0 %v952, 1
        %v1230 = vpop.permute.xlu0 %1229
        %v1237 = vsel %vm365, 0.0, %v1220
        %v1238 = vsel %vm365, 0.0, %v1222
        %v1239 = vsel %vm365, 0.0, %v1224
        %v1240 = vsel %vm365, 0.0, %v1226
        %v1241 = vsel %vm365, 0.0, %v1228
        %v1242 = vsel %vm365, 0.0, %v1230
        %1243 = vrot.lane.b32.xlu0 %v947, 127
        %v1244 = vpop.permute.xlu0 %1243
        %1245 = vrot.lane.b32.xlu0 %v948, 127
        %v1246 = vpop.permute.xlu0 %1245
        %1247 = vrot.lane.b32.xlu0 %v949, 127
        %v1248 = vpop.permute.xlu0 %1247
        %1249 = vrot.lane.b32.xlu0 %v950, 127
        %v1250 = vpop.permute.xlu0 %1249
        %1251 = vrot.lane.b32.xlu0 %v951, 127
        %v1252 = vpop.permute.xlu0 %1251
        %1253 = vrot.lane.b32.xlu0 %v952, 127
        %v1254 = vpop.permute.xlu0 %1253
        %v1261 = vsel %vm390, %v1244, 0.0
        %v1262 = vsel %vm390, %v1246, 0.0
        %v1263 = vsel %vm390, %v1248, 0.0
        %v1264 = vsel %vm390, %v1250, 0.0
        %v1265 = vsel %vm390, %v1252, 0.0
        %v1266 = vsel %vm390, %v1254, 0.0
        %v1273 = vrot.slane %v1237, 7
        %v1274 = vrot.slane %v1238, 7
        %v1275 = vsel %vm403, %v1273, %v1274
        %v1276 = vrot.slane %v1239, 7
        %v1277 = vrot.slane %v1240, 7
        %v1278 = vsel %vm403, %v1276, %v1277
        %v1279 = vrot.slane %v1241, 7
        %v1280 = vrot.slane %v1242, 7
        %v1281 = vsel %vm403, %v1279, %v1280
        %v1288 = vsel %vm403, 0.0, %v1273
        %v1289 = vsel %vm403, 0.0, %v1276
        %v1290 = vsel %vm403, 0.0, %v1279
        %v1291 = vrot.slane %v947, 7
        %v1292 = vrot.slane %v948, 7
        %v1293 = vsel %vm403, %v1291, %v1292
        %v1294 = vrot.slane %v949, 7
        %v1295 = vrot.slane %v950, 7
        %v1296 = vsel %vm403, %v1294, %v1295
        %v1297 = vrot.slane %v951, 7
        %v1298 = vrot.slane %v952, 7
        %v1299 = vsel %vm403, %v1297, %v1298
        %v1306 = vsel %vm403, 0.0, %v1291
        %v1307 = vsel %vm403, 0.0, %v1294
        %v1308 = vsel %vm403, 0.0, %v1297
        %v1315 = vrot.slane %v1261, 7
        %v1316 = vrot.slane %v1262, 7
        %v1317 = vsel %vm403, %v1315, %v1316
        %v1318 = vrot.slane %v1263, 7
        %v1319 = vrot.slane %v1264, 7
        %v1320 = vsel %vm403, %v1318, %v1319
        %v1321 = vrot.slane %v1265, 7
        %v1322 = vrot.slane %v1266, 7
        %v1323 = vsel %vm403, %v1321, %v1322
        %v1330 = vsel %vm403, 0.0, %v1315
        %v1331 = vsel %vm403, 0.0, %v1318
        %v1332 = vsel %vm403, 0.0, %v1321
        %v1333 = vrot.slane %v1237, 1
        %v1334 = vrot.slane %v1238, 1
        %v1335 = vsel %vm464, %v1333, %v1334
        %v1336 = vrot.slane %v1239, 1
        %v1337 = vrot.slane %v1240, 1
        %v1338 = vsel %vm464, %v1336, %v1337
        %v1339 = vrot.slane %v1241, 1
        %v1340 = vrot.slane %v1242, 1
        %v1341 = vsel %vm464, %v1339, %v1340
        %v1348 = vsel %vm464, %v1334, 0.0
        %v1349 = vsel %vm464, %v1337, 0.0
        %v1350 = vsel %vm464, %v1340, 0.0
        %v1351 = vrot.slane %v947, 1
        %v1352 = vrot.slane %v948, 1
        %v1353 = vsel %vm464, %v1351, %v1352
        %v1354 = vrot.slane %v949, 1
        %v1355 = vrot.slane %v950, 1
        %v1356 = vsel %vm464, %v1354, %v1355
        %v1357 = vrot.slane %v951, 1
        %v1358 = vrot.slane %v952, 1
        %v1359 = vsel %vm464, %v1357, %v1358
        %v1366 = vsel %vm464, %v1352, 0.0
        %v1367 = vsel %vm464, %v1355, 0.0
        %v1368 = vsel %vm464, %v1358, 0.0
        %v1369 = vrot.slane %v1261, 1
        %v1370 = vrot.slane %v1262, 1
        %v1371 = vsel %vm464, %v1369, %v1370
        %v1372 = vrot.slane %v1263, 1
        %v1373 = vrot.slane %v1264, 1
        %v1374 = vsel %vm464, %v1372, %v1373
        %v1375 = vrot.slane %v1265, 1
        %v1376 = vrot.slane %v1266, 1
        %v1377 = vsel %vm464, %v1375, %v1376
        %v1384 = vsel %vm464, %v1370, 0.0
        %v1385 = vsel %vm464, %v1373, 0.0
        %v1386 = vsel %vm464, %v1376, 0.0
        %1393 = vrot.lane.b32.xlu0 %v1207, 1
        %v1394 = vpop.permute.xlu0 %1393
        %1395 = vrot.lane.b32.xlu0 %v1208, 1
        %v1396 = vpop.permute.xlu0 %1395
        %1397 = vrot.lane.b32.xlu0 %v1209, 1
        %v1398 = vpop.permute.xlu0 %1397
        %1399 = vrot.lane.b32.xlu0 %v1210, 1
        %v1400 = vpop.permute.xlu0 %1399
        %1401 = vrot.lane.b32.xlu0 %v1211, 1
        %v1402 = vpop.permute.xlu0 %1401
        %1403 = vrot.lane.b32.xlu0 %v1212, 1
        %v1404 = vpop.permute.xlu0 %1403
        %v1411 = vsel %vm365, 0.0, %v1394
        %v1412 = vsel %vm365, 0.0, %v1396
        %v1413 = vsel %vm365, 0.0, %v1398
        %v1414 = vsel %vm365, 0.0, %v1400
        %v1415 = vsel %vm365, 0.0, %v1402
        %v1416 = vsel %vm365, 0.0, %v1404
        %1417 = vrot.lane.b32.xlu0 %v1207, 127
        %v1418 = vpop.permute.xlu0 %1417
        %1419 = vrot.lane.b32.xlu0 %v1208, 127
        %v1420 = vpop.permute.xlu0 %1419
        %1421 = vrot.lane.b32.xlu0 %v1209, 127
        %v1422 = vpop.permute.xlu0 %1421
        %1423 = vrot.lane.b32.xlu0 %v1210, 127
        %v1424 = vpop.permute.xlu0 %1423
        %1425 = vrot.lane.b32.xlu0 %v1211, 127
        %v1426 = vpop.permute.xlu0 %1425
        %1427 = vrot.lane.b32.xlu0 %v1212, 127
        %v1428 = vpop.permute.xlu0 %1427
        %v1435 = vsel %vm390, %v1418, 0.0
        %v1436 = vsel %vm390, %v1420, 0.0
        %v1437 = vsel %vm390, %v1422, 0.0
        %v1438 = vsel %vm390, %v1424, 0.0
        %v1439 = vsel %vm390, %v1426, 0.0
        %v1440 = vsel %vm390, %v1428, 0.0
        %v1447 = vrot.slane %v1411, 7
        %v1448 = vrot.slane %v1412, 7
        %v1449 = vsel %vm403, %v1447, %v1448
        %v1450 = vrot.slane %v1413, 7
        %v1451 = vrot.slane %v1414, 7
        %v1452 = vsel %vm403, %v1450, %v1451
        %v1453 = vrot.slane %v1415, 7
        %v1454 = vrot.slane %v1416, 7
        %v1455 = vsel %vm403, %v1453, %v1454
        %v1462 = vsel %vm403, 0.0, %v1447
        %v1463 = vsel %vm403, 0.0, %v1450
        %v1464 = vsel %vm403, 0.0, %v1453
        %v1465 = vrot.slane %v1207, 7
        %v1466 = vrot.slane %v1208, 7
        %v1467 = vsel %vm403, %v1465, %v1466
        %v1468 = vrot.slane %v1209, 7
        %v1469 = vrot.slane %v1210, 7
        %v1470 = vsel %vm403, %v1468, %v1469
        %v1471 = vrot.slane %v1211, 7
        %v1472 = vrot.slane %v1212, 7
        %v1473 = vsel %vm403, %v1471, %v1472
        %v1480 = vsel %vm403, 0.0, %v1465
        %v1481 = vsel %vm403, 0.0, %v1468
        %v1482 = vsel %vm403, 0.0, %v1471
        %v1489 = vrot.slane %v1435, 7
        %v1490 = vrot.slane %v1436, 7
        %v1491 = vsel %vm403, %v1489, %v1490
        %v1492 = vrot.slane %v1437, 7
        %v1493 = vrot.slane %v1438, 7
        %v1494 = vsel %vm403, %v1492, %v1493
        %v1495 = vrot.slane %v1439, 7
        %v1496 = vrot.slane %v1440, 7
        %v1497 = vsel %vm403, %v1495, %v1496
        %v1504 = vsel %vm403, 0.0, %v1489
        %v1505 = vsel %vm403, 0.0, %v1492
        %v1506 = vsel %vm403, 0.0, %v1495
        %v1507 = vrot.slane %v1411, 1
        %v1508 = vrot.slane %v1412, 1
        %v1509 = vsel %vm464, %v1507, %v1508
        %v1510 = vrot.slane %v1413, 1
        %v1511 = vrot.slane %v1414, 1
        %v1512 = vsel %vm464, %v1510, %v1511
        %v1513 = vrot.slane %v1415, 1
        %v1514 = vrot.slane %v1416, 1
        %v1515 = vsel %vm464, %v1513, %v1514
        %v1522 = vsel %vm464, %v1508, 0.0
        %v1523 = vsel %vm464, %v1511, 0.0
        %v1524 = vsel %vm464, %v1514, 0.0
        %v1525 = vrot.slane %v1207, 1
        %v1526 = vrot.slane %v1208, 1
        %v1527 = vsel %vm464, %v1525, %v1526
        %v1528 = vrot.slane %v1209, 1
        %v1529 = vrot.slane %v1210, 1
        %v1530 = vsel %vm464, %v1528, %v1529
        %v1531 = vrot.slane %v1211, 1
        %v1532 = vrot.slane %v1212, 1
        %v1533 = vsel %vm464, %v1531, %v1532
        %v1540 = vsel %vm464, %v1526, 0.0
        %v1541 = vsel %vm464, %v1529, 0.0
        %v1542 = vsel %vm464, %v1532, 0.0
        %v1543 = vrot.slane %v1435, 1
        %v1544 = vrot.slane %v1436, 1
        %v1545 = vsel %vm464, %v1543, %v1544
        %v1546 = vrot.slane %v1437, 1
        %v1547 = vrot.slane %v1438, 1
        %v1548 = vsel %vm464, %v1546, %v1547
        %v1549 = vrot.slane %v1439, 1
        %v1550 = vrot.slane %v1440, 1
        %v1551 = vsel %vm464, %v1549, %v1550
        %v1558 = vsel %vm464, %v1544, 0.0
        %v1559 = vsel %vm464, %v1547, 0.0
        %v1560 = vsel %vm464, %v1550, 0.0
        %s1561 = sld [smem:[#allocation10]]
        %v1562 = vstv %s1561
        %v1563 = vadd.f32 %v328, %v1562
        %v1564 = vadd.f32 %v329, %v1562
        %v1565 = vadd.f32 %v330, %v1562
        %v1566 = vadd.f32 %v331, %v1562
        %v1567 = vadd.f32 %v332, %v1562
        %v1568 = vadd.f32 %v333, %v1562
        %s1569 = sld [smem:[#allocation8]]
        %v1570 = vstv %s1569
        %v1571 = vmul.f32 %v1570, %v1288
        %v1572 = vmul.f32 %v1570, %v1275
        %v1573 = vmul.f32 %v1570, %v1289
        %v1574 = vmul.f32 %v1570, %v1278
        %v1575 = vmul.f32 %v1570, %v1290
        %v1576 = vmul.f32 %v1570, %v1281
        %v1577 = vadd.f32 %v1563, %v1571
        %v1578 = vadd.f32 %v1564, %v1572
        %v1579 = vadd.f32 %v1565, %v1573
        %v1580 = vadd.f32 %v1566, %v1574
        %v1581 = vadd.f32 %v1567, %v1575
        %v1582 = vadd.f32 %v1568, %v1576
        %s1583 = sld [smem:[#allocation8 + $0x4]]
        %v1584 = vstv %s1583
        %v1585 = vmul.f32 %v1584, %v1306
        %v1586 = vmul.f32 %v1584, %v1293
        %v1587 = vmul.f32 %v1584, %v1307
        %v1588 = vmul.f32 %v1584, %v1296
        %v1589 = vmul.f32 %v1584, %v1308
        %v1590 = vmul.f32 %v1584, %v1299
        %v1591 = vadd.f32 %v1577, %v1585
        %v1592 = vadd.f32 %v1578, %v1586
        %v1593 = vadd.f32 %v1579, %v1587
        %v1594 = vadd.f32 %v1580, %v1588
        %v1595 = vadd.f32 %v1581, %v1589
        %v1596 = vadd.f32 %v1582, %v1590
        %s1597 = sld [smem:[#allocation8 + $0x8]]
        %v1598 = vstv %s1597
        %v1599 = vmul.f32 %v1598, %v1330
        %v1600 = vmul.f32 %v1598, %v1317
        %v1601 = vmul.f32 %v1598, %v1331
        %v1602 = vmul.f32 %v1598, %v1320
        %v1603 = vmul.f32 %v1598, %v1332
        %v1604 = vmul.f32 %v1598, %v1323
        %v1605 = vadd.f32 %v1591, %v1599
        %v1606 = vadd.f32 %v1592, %v1600
        %v1607 = vadd.f32 %v1593, %v1601
        %v1608 = vadd.f32 %v1594, %v1602
        %v1609 = vadd.f32 %v1595, %v1603
        %v1610 = vadd.f32 %v1596, %v1604
        %s1611 = sld [smem:[#allocation8 + $0xc]]
        %v1612 = vstv %s1611
        %v1613 = vmul.f32 %v1612, %v1237
        %v1614 = vmul.f32 %v1612, %v1238
        %v1615 = vmul.f32 %v1612, %v1239
        %v1616 = vmul.f32 %v1612, %v1240
        %v1617 = vmul.f32 %v1612, %v1241
        %v1618 = vmul.f32 %v1612, %v1242
        %v1619 = vadd.f32 %v1605, %v1613
        %v1620 = vadd.f32 %v1606, %v1614
        %v1621 = vadd.f32 %v1607, %v1615
        %v1622 = vadd.f32 %v1608, %v1616
        %v1623 = vadd.f32 %v1609, %v1617
        %v1624 = vadd.f32 %v1610, %v1618
        %s1625 = sld [smem:[#allocation8 + $0x10]]
        %v1626 = vstv %s1625
        %v1627 = vmul.f32 %v1626, %v947
        %v1628 = vmul.f32 %v1626, %v948
        %v1629 = vmul.f32 %v1626, %v949
        %v1630 = vmul.f32 %v1626, %v950
        %v1631 = vmul.f32 %v1626, %v951
        %v1632 = vmul.f32 %v1626, %v952
        %v1633 = vadd.f32 %v1619, %v1627
        %v1634 = vadd.f32 %v1620, %v1628
        %v1635 = vadd.f32 %v1621, %v1629
        %v1636 = vadd.f32 %v1622, %v1630
        %v1637 = vadd.f32 %v1623, %v1631
        %v1638 = vadd.f32 %v1624, %v1632
        %s1639 = sld [smem:[#allocation8 + $0x14]]
        %v1640 = vstv %s1639
        %v1641 = vmul.f32 %v1640, %v1261
        %v1642 = vmul.f32 %v1640, %v1262
        %v1643 = vmul.f32 %v1640, %v1263
        %v1644 = vmul.f32 %v1640, %v1264
        %v1645 = vmul.f32 %v1640, %v1265
        %v1646 = vmul.f32 %v1640, %v1266
        %v1647 = vadd.f32 %v1633, %v1641
        %v1648 = vadd.f32 %v1634, %v1642
        %v1649 = vadd.f32 %v1635, %v1643
        %v1650 = vadd.f32 %v1636, %v1644
        %v1651 = vadd.f32 %v1637, %v1645
        %v1652 = vadd.f32 %v1638, %v1646
        %s1653 = sld [smem:[#allocation8 + $0x18]]
        %v1654 = vstv %s1653
        %v1655 = vmul.f32 %v1654, %v1335
        %v1656 = vmul.f32 %v1654, %v1348
        %v1657 = vmul.f32 %v1654, %v1338
        %v1658 = vmul.f32 %v1654, %v1349
        %v1659 = vmul.f32 %v1654, %v1341
        %v1660 = vmul.f32 %v1654, %v1350
        %v1661 = vadd.f32 %v1647, %v1655
        %v1662 = vadd.f32 %v1648, %v1656
        %v1663 = vadd.f32 %v1649, %v1657
        %v1664 = vadd.f32 %v1650, %v1658
        %v1665 = vadd.f32 %v1651, %v1659
        %v1666 = vadd.f32 %v1652, %v1660
        %s1667 = sld [smem:[#allocation8 + $0x1c]]
        %v1668 = vstv %s1667
        %v1669 = vmul.f32 %v1668, %v1353
        %v1670 = vmul.f32 %v1668, %v1366
        %v1671 = vmul.f32 %v1668, %v1356
        %v1672 = vmul.f32 %v1668, %v1367
        %v1673 = vmul.f32 %v1668, %v1359
        %v1674 = vmul.f32 %v1668, %v1368
        %v1675 = vadd.f32 %v1661, %v1669
        %v1676 = vadd.f32 %v1662, %v1670
        %v1677 = vadd.f32 %v1663, %v1671
        %v1678 = vadd.f32 %v1664, %v1672
        %v1679 = vadd.f32 %v1665, %v1673
        %v1680 = vadd.f32 %v1666, %v1674
        %s1681 = sld [smem:[#allocation8 + $0x20]]
        %v1682 = vstv %s1681
        %v1683 = vmul.f32 %v1682, %v1371
        %v1684 = vmul.f32 %v1682, %v1384
        %v1685 = vmul.f32 %v1682, %v1374
        %v1686 = vmul.f32 %v1682, %v1385
        %v1687 = vmul.f32 %v1682, %v1377
        %v1688 = vmul.f32 %v1682, %v1386
        %v1689 = vadd.f32 %v1675, %v1683
        %v1690 = vadd.f32 %v1676, %v1684
        %v1691 = vadd.f32 %v1677, %v1685
        %v1692 = vadd.f32 %v1678, %v1686
        %v1693 = vadd.f32 %v1679, %v1687
        %v1694 = vadd.f32 %v1680, %v1688
        %s1695 = sld [smem:[#allocation8 + $0x2]]
        %v1696 = vstv %s1695
        %v1697 = vmul.f32 %v1696, %v1462
        %v1698 = vmul.f32 %v1696, %v1449
        %v1699 = vmul.f32 %v1696, %v1463
        %v1700 = vmul.f32 %v1696, %v1452
        %v1701 = vmul.f32 %v1696, %v1464
        %v1702 = vmul.f32 %v1696, %v1455
        %v1703 = vadd.f32 %v1689, %v1697
        %v1704 = vadd.f32 %v1690, %v1698
        %v1705 = vadd.f32 %v1691, %v1699
        %v1706 = vadd.f32 %v1692, %v1700
        %v1707 = vadd.f32 %v1693, %v1701
        %v1708 = vadd.f32 %v1694, %v1702
        %s1709 = sld [smem:[#allocation8 + $0x6]]
        %v1710 = vstv %s1709
        %v1711 = vmul.f32 %v1710, %v1480
        %v1712 = vmul.f32 %v1710, %v1467
        %v1713 = vmul.f32 %v1710, %v1481
        %v1714 = vmul.f32 %v1710, %v1470
        %v1715 = vmul.f32 %v1710, %v1482
        %v1716 = vmul.f32 %v1710, %v1473
        %v1717 = vadd.f32 %v1703, %v1711
        %v1718 = vadd.f32 %v1704, %v1712
        %v1719 = vadd.f32 %v1705, %v1713
        %v1720 = vadd.f32 %v1706, %v1714
        %v1721 = vadd.f32 %v1707, %v1715
        %v1722 = vadd.f32 %v1708, %v1716
        %s1723 = sld [smem:[#allocation8 + $0xa]]
        %v1724 = vstv %s1723
        %v1725 = vmul.f32 %v1724, %v1504
        %v1726 = vmul.f32 %v1724, %v1491
        %v1727 = vmul.f32 %v1724, %v1505
        %v1728 = vmul.f32 %v1724, %v1494
        %v1729 = vmul.f32 %v1724, %v1506
        %v1730 = vmul.f32 %v1724, %v1497
        %v1731 = vadd.f32 %v1717, %v1725
        %v1732 = vadd.f32 %v1718, %v1726
        %v1733 = vadd.f32 %v1719, %v1727
        %v1734 = vadd.f32 %v1720, %v1728
        %v1735 = vadd.f32 %v1721, %v1729
        %v1736 = vadd.f32 %v1722, %v1730
        %s1737 = sld [smem:[#allocation8 + $0xe]]
        %v1738 = vstv %s1737
        %v1739 = vmul.f32 %v1738, %v1411
        %v1740 = vmul.f32 %v1738, %v1412
        %v1741 = vmul.f32 %v1738, %v1413
        %v1742 = vmul.f32 %v1738, %v1414
        %v1743 = vmul.f32 %v1738, %v1415
        %v1744 = vmul.f32 %v1738, %v1416
        %v1745 = vadd.f32 %v1731, %v1739
        %v1746 = vadd.f32 %v1732, %v1740
        %v1747 = vadd.f32 %v1733, %v1741
        %v1748 = vadd.f32 %v1734, %v1742
        %v1749 = vadd.f32 %v1735, %v1743
        %v1750 = vadd.f32 %v1736, %v1744
        %s1751 = sld [smem:[#allocation8 + $0x12]]
        %v1752 = vstv %s1751
        %v1753 = vmul.f32 %v1752, %v1207
        %v1754 = vmul.f32 %v1752, %v1208
        %v1755 = vmul.f32 %v1752, %v1209
        %v1756 = vmul.f32 %v1752, %v1210
        %v1757 = vmul.f32 %v1752, %v1211
        %v1758 = vmul.f32 %v1752, %v1212
        %v1759 = vadd.f32 %v1745, %v1753
        %v1760 = vadd.f32 %v1746, %v1754
        %v1761 = vadd.f32 %v1747, %v1755
        %v1762 = vadd.f32 %v1748, %v1756
        %v1763 = vadd.f32 %v1749, %v1757
        %v1764 = vadd.f32 %v1750, %v1758
        %s1765 = sld [smem:[#allocation8 + $0x16]]
        %v1766 = vstv %s1765
        %v1767 = vmul.f32 %v1766, %v1435
        %v1768 = vmul.f32 %v1766, %v1436
        %v1769 = vmul.f32 %v1766, %v1437
        %v1770 = vmul.f32 %v1766, %v1438
        %v1771 = vmul.f32 %v1766, %v1439
        %v1772 = vmul.f32 %v1766, %v1440
        %v1773 = vadd.f32 %v1759, %v1767
        %v1774 = vadd.f32 %v1760, %v1768
        %v1775 = vadd.f32 %v1761, %v1769
        %v1776 = vadd.f32 %v1762, %v1770
        %v1777 = vadd.f32 %v1763, %v1771
        %v1778 = vadd.f32 %v1764, %v1772
        %s1779 = sld [smem:[#allocation8 + $0x1a]]
        %v1780 = vstv %s1779
        %v1781 = vmul.f32 %v1780, %v1509
        %v1782 = vmul.f32 %v1780, %v1522
        %v1783 = vmul.f32 %v1780, %v1512
        %v1784 = vmul.f32 %v1780, %v1523
        %v1785 = vmul.f32 %v1780, %v1515
        %v1786 = vmul.f32 %v1780, %v1524
        %v1787 = vadd.f32 %v1773, %v1781
        %v1788 = vadd.f32 %v1774, %v1782
        %v1789 = vadd.f32 %v1775, %v1783
        %v1790 = vadd.f32 %v1776, %v1784
        %v1791 = vadd.f32 %v1777, %v1785
        %v1792 = vadd.f32 %v1778, %v1786
        %s1793 = sld [smem:[#allocation8 + $0x1e]]
        %v1794 = vstv %s1793
        %v1795 = vmul.f32 %v1794, %v1527
        %v1796 = vmul.f32 %v1794, %v1540
        %v1797 = vmul.f32 %v1794, %v1530
        %v1798 = vmul.f32 %v1794, %v1541
        %v1799 = vmul.f32 %v1794, %v1533
        %v1800 = vmul.f32 %v1794, %v1542
        %v1801 = vadd.f32 %v1787, %v1795
        %v1802 = vadd.f32 %v1788, %v1796
        %v1803 = vadd.f32 %v1789, %v1797
        %v1804 = vadd.f32 %v1790, %v1798
        %v1805 = vadd.f32 %v1791, %v1799
        %v1806 = vadd.f32 %v1792, %v1800
        %s1807 = sld [smem:[#allocation8 + $0x22]]
        %v1808 = vstv %s1807
        %v1809 = vmul.f32 %v1808, %v1545
        %v1810 = vmul.f32 %v1808, %v1558
        %v1811 = vmul.f32 %v1808, %v1548
        %v1812 = vmul.f32 %v1808, %v1559
        %v1813 = vmul.f32 %v1808, %v1551
        %v1814 = vmul.f32 %v1808, %v1560
        %v1815 = vadd.f32 %v1801, %v1809
        %v1816 = vadd.f32 %v1802, %v1810
        %v1817 = vadd.f32 %v1803, %v1811
        %v1818 = vadd.f32 %v1804, %v1812
        %v1819 = vadd.f32 %v1805, %v1813
        %v1820 = vadd.f32 %v1806, %v1814
        %s1821 = sld [smem:[#allocation10 + $0x1]]
        %v1822 = vstv %s1821
        %v1823 = vadd.f32 %v335, %v1822
        %v1824 = vadd.f32 %v336, %v1822
        %v1825 = vadd.f32 %v337, %v1822
        %v1826 = vadd.f32 %v338, %v1822
        %v1827 = vadd.f32 %v339, %v1822
        %v1828 = vadd.f32 %v340, %v1822
        %s1829 = sld [smem:[#allocation8 + $0x1]]
        %v1830 = vstv %s1829
        %v1831 = vmul.f32 %v1830, %v1288
        %v1832 = vmul.f32 %v1830, %v1275
        %v1833 = vmul.f32 %v1830, %v1289
        %v1834 = vmul.f32 %v1830, %v1278
        %v1835 = vmul.f32 %v1830, %v1290
        %v1836 = vmul.f32 %v1830, %v1281
        %v1837 = vadd.f32 %v1823, %v1831
        %v1838 = vadd.f32 %v1824, %v1832
        %v1839 = vadd.f32 %v1825, %v1833
        %v1840 = vadd.f32 %v1826, %v1834
        %v1841 = vadd.f32 %v1827, %v1835
        %v1842 = vadd.f32 %v1828, %v1836
        %s1843 = sld [smem:[#allocation8 + $0x5]]
        %v1844 = vstv %s1843
        %v1845 = vmul.f32 %v1844, %v1306
        %v1846 = vmul.f32 %v1844, %v1293
        %v1847 = vmul.f32 %v1844, %v1307
        %v1848 = vmul.f32 %v1844, %v1296
        %v1849 = vmul.f32 %v1844, %v1308
        %v1850 = vmul.f32 %v1844, %v1299
        %v1851 = vadd.f32 %v1837, %v1845
        %v1852 = vadd.f32 %v1838, %v1846
        %v1853 = vadd.f32 %v1839, %v1847
        %v1854 = vadd.f32 %v1840, %v1848
        %v1855 = vadd.f32 %v1841, %v1849
        %v1856 = vadd.f32 %v1842, %v1850
        %s1857 = sld [smem:[#allocation8 + $0x9]]
        %v1858 = vstv %s1857
        %v1859 = vmul.f32 %v1858, %v1330
        %v1860 = vmul.f32 %v1858, %v1317
        %v1861 = vmul.f32 %v1858, %v1331
        %v1862 = vmul.f32 %v1858, %v1320
        %v1863 = vmul.f32 %v1858, %v1332
        %v1864 = vmul.f32 %v1858, %v1323
        %v1865 = vadd.f32 %v1851, %v1859
        %v1866 = vadd.f32 %v1852, %v1860
        %v1867 = vadd.f32 %v1853, %v1861
        %v1868 = vadd.f32 %v1854, %v1862
        %v1869 = vadd.f32 %v1855, %v1863
        %v1870 = vadd.f32 %v1856, %v1864
        %s1871 = sld [smem:[#allocation8 + $0xd]]
        %v1872 = vstv %s1871
        %v1873 = vmul.f32 %v1872, %v1237
        %v1874 = vmul.f32 %v1872, %v1238
        %v1875 = vmul.f32 %v1872, %v1239
        %v1876 = vmul.f32 %v1872, %v1240
        %v1877 = vmul.f32 %v1872, %v1241
        %v1878 = vmul.f32 %v1872, %v1242
        %v1879 = vadd.f32 %v1865, %v1873
        %v1880 = vadd.f32 %v1866, %v1874
        %v1881 = vadd.f32 %v1867, %v1875
        %v1882 = vadd.f32 %v1868, %v1876
        %v1883 = vadd.f32 %v1869, %v1877
        %v1884 = vadd.f32 %v1870, %v1878
        %s1885 = sld [smem:[#allocation8 + $0x11]]
        %v1886 = vstv %s1885
        %v1887 = vmul.f32 %v1886, %v947
        %v1888 = vmul.f32 %v1886, %v948
        %v1889 = vmul.f32 %v1886, %v949
        %v1890 = vmul.f32 %v1886, %v950
        %v1891 = vmul.f32 %v1886, %v951
        %v1892 = vmul.f32 %v1886, %v952
        %v1893 = vadd.f32 %v1879, %v1887
        %v1894 = vadd.f32 %v1880, %v1888
        %v1895 = vadd.f32 %v1881, %v1889
        %v1896 = vadd.f32 %v1882, %v1890
        %v1897 = vadd.f32 %v1883, %v1891
        %v1898 = vadd.f32 %v1884, %v1892
        %s1899 = sld [smem:[#allocation8 + $0x15]]
        %v1900 = vstv %s1899
        %v1901 = vmul.f32 %v1900, %v1261
        %v1902 = vmul.f32 %v1900, %v1262
        %v1903 = vmul.f32 %v1900, %v1263
        %v1904 = vmul.f32 %v1900, %v1264
        %v1905 = vmul.f32 %v1900, %v1265
        %v1906 = vmul.f32 %v1900, %v1266
        %v1907 = vadd.f32 %v1893, %v1901
        %v1908 = vadd.f32 %v1894, %v1902
        %v1909 = vadd.f32 %v1895, %v1903
        %v1910 = vadd.f32 %v1896, %v1904
        %v1911 = vadd.f32 %v1897, %v1905
        %v1912 = vadd.f32 %v1898, %v1906
        %s1913 = sld [smem:[#allocation8 + $0x19]]
        %v1914 = vstv %s1913
        %v1915 = vmul.f32 %v1914, %v1335
        %v1916 = vmul.f32 %v1914, %v1348
        %v1917 = vmul.f32 %v1914, %v1338
        %v1918 = vmul.f32 %v1914, %v1349
        %v1919 = vmul.f32 %v1914, %v1341
        %v1920 = vmul.f32 %v1914, %v1350
        %v1921 = vadd.f32 %v1907, %v1915
        %v1922 = vadd.f32 %v1908, %v1916
        %v1923 = vadd.f32 %v1909, %v1917
        %v1924 = vadd.f32 %v1910, %v1918
        %v1925 = vadd.f32 %v1911, %v1919
        %v1926 = vadd.f32 %v1912, %v1920
        %s1927 = sld [smem:[#allocation8 + $0x1d]]
        %v1928 = vstv %s1927
        %v1929 = vmul.f32 %v1928, %v1353
        %v1930 = vmul.f32 %v1928, %v1366
        %v1931 = vmul.f32 %v1928, %v1356
        %v1932 = vmul.f32 %v1928, %v1367
        %v1933 = vmul.f32 %v1928, %v1359
        %v1934 = vmul.f32 %v1928, %v1368
        %v1935 = vadd.f32 %v1921, %v1929
        %v1936 = vadd.f32 %v1922, %v1930
        %v1937 = vadd.f32 %v1923, %v1931
        %v1938 = vadd.f32 %v1924, %v1932
        %v1939 = vadd.f32 %v1925, %v1933
        %v1940 = vadd.f32 %v1926, %v1934
        %s1941 = sld [smem:[#allocation8 + $0x21]]
        %v1942 = vstv %s1941
        %v1943 = vmul.f32 %v1942, %v1371
        %v1944 = vmul.f32 %v1942, %v1384
        %v1945 = vmul.f32 %v1942, %v1374
        %v1946 = vmul.f32 %v1942, %v1385
        %v1947 = vmul.f32 %v1942, %v1377
        %v1948 = vmul.f32 %v1942, %v1386
        %v1949 = vadd.f32 %v1935, %v1943
        %v1950 = vadd.f32 %v1936, %v1944
        %v1951 = vadd.f32 %v1937, %v1945
        %v1952 = vadd.f32 %v1938, %v1946
        %v1953 = vadd.f32 %v1939, %v1947
        %v1954 = vadd.f32 %v1940, %v1948
        %s1955 = sld [smem:[#allocation8 + $0x3]]
        %v1956 = vstv %s1955
        %v1957 = vmul.f32 %v1956, %v1462
        %v1958 = vmul.f32 %v1956, %v1449
        %v1959 = vmul.f32 %v1956, %v1463
        %v1960 = vmul.f32 %v1956, %v1452
        %v1961 = vmul.f32 %v1956, %v1464
        %v1962 = vmul.f32 %v1956, %v1455
        %v1963 = vadd.f32 %v1949, %v1957
        %v1964 = vadd.f32 %v1950, %v1958
        %v1965 = vadd.f32 %v1951, %v1959
        %v1966 = vadd.f32 %v1952, %v1960
        %v1967 = vadd.f32 %v1953, %v1961
        %v1968 = vadd.f32 %v1954, %v1962
        %s1969 = sld [smem:[#allocation8 + $0x7]]
        %v1970 = vstv %s1969
        %v1971 = vmul.f32 %v1970, %v1480
        %v1972 = vmul.f32 %v1970, %v1467
        %v1973 = vmul.f32 %v1970, %v1481
        %v1974 = vmul.f32 %v1970, %v1470
        %v1975 = vmul.f32 %v1970, %v1482
        %v1976 = vmul.f32 %v1970, %v1473
        %v1977 = vadd.f32 %v1963, %v1971
        %v1978 = vadd.f32 %v1964, %v1972
        %v1979 = vadd.f32 %v1965, %v1973
        %v1980 = vadd.f32 %v1966, %v1974
        %v1981 = vadd.f32 %v1967, %v1975
        %v1982 = vadd.f32 %v1968, %v1976
        %s1983 = sld [smem:[#allocation8 + $0xb]]
        %v1984 = vstv %s1983
        %v1985 = vmul.f32 %v1984, %v1504
        %v1986 = vmul.f32 %v1984, %v1491
        %v1987 = vmul.f32 %v1984, %v1505
        %v1988 = vmul.f32 %v1984, %v1494
        %v1989 = vmul.f32 %v1984, %v1506
        %v1990 = vmul.f32 %v1984, %v1497
        %v1991 = vadd.f32 %v1977, %v1985
        %v1992 = vadd.f32 %v1978, %v1986
        %v1993 = vadd.f32 %v1979, %v1987
        %v1994 = vadd.f32 %v1980, %v1988
        %v1995 = vadd.f32 %v1981, %v1989
        %v1996 = vadd.f32 %v1982, %v1990
        %s1997 = sld [smem:[#allocation8 + $0xf]]
        %v1998 = vstv %s1997
        %v1999 = vmul.f32 %v1998, %v1411
        %v2000 = vmul.f32 %v1998, %v1412
        %v2001 = vmul.f32 %v1998, %v1413
        %v2002 = vmul.f32 %v1998, %v1414
        %v2003 = vmul.f32 %v1998, %v1415
        %v2004 = vmul.f32 %v1998, %v1416
        %v2005 = vadd.f32 %v1991, %v1999
        %v2006 = vadd.f32 %v1992, %v2000
        %v2007 = vadd.f32 %v1993, %v2001
        %v2008 = vadd.f32 %v1994, %v2002
        %v2009 = vadd.f32 %v1995, %v2003
        %v2010 = vadd.f32 %v1996, %v2004
        %s2011 = sld [smem:[#allocation8 + $0x13]]
        %v2012 = vstv %s2011
        %v2013 = vmul.f32 %v2012, %v1207
        %v2014 = vmul.f32 %v2012, %v1208
        %v2015 = vmul.f32 %v2012, %v1209
        %v2016 = vmul.f32 %v2012, %v1210
        %v2017 = vmul.f32 %v2012, %v1211
        %v2018 = vmul.f32 %v2012, %v1212
        %v2019 = vadd.f32 %v2005, %v2013
        %v2020 = vadd.f32 %v2006, %v2014
        %v2021 = vadd.f32 %v2007, %v2015
        %v2022 = vadd.f32 %v2008, %v2016
        %v2023 = vadd.f32 %v2009, %v2017
        %v2024 = vadd.f32 %v2010, %v2018
        %s2025 = sld [smem:[#allocation8 + $0x17]]
        %v2026 = vstv %s2025
        %v2027 = vmul.f32 %v2026, %v1435
        %v2028 = vmul.f32 %v2026, %v1436
        %v2029 = vmul.f32 %v2026, %v1437
        %v2030 = vmul.f32 %v2026, %v1438
        %v2031 = vmul.f32 %v2026, %v1439
        %v2032 = vmul.f32 %v2026, %v1440
        %v2033 = vadd.f32 %v2019, %v2027
        %v2034 = vadd.f32 %v2020, %v2028
        %v2035 = vadd.f32 %v2021, %v2029
        %v2036 = vadd.f32 %v2022, %v2030
        %v2037 = vadd.f32 %v2023, %v2031
        %v2038 = vadd.f32 %v2024, %v2032
        %s2039 = sld [smem:[#allocation8 + $0x1b]]
        %v2040 = vstv %s2039
        %v2041 = vmul.f32 %v2040, %v1509
        %v2042 = vmul.f32 %v2040, %v1522
        %v2043 = vmul.f32 %v2040, %v1512
        %v2044 = vmul.f32 %v2040, %v1523
        %v2045 = vmul.f32 %v2040, %v1515
        %v2046 = vmul.f32 %v2040, %v1524
        %v2047 = vadd.f32 %v2033, %v2041
        %v2048 = vadd.f32 %v2034, %v2042
        %v2049 = vadd.f32 %v2035, %v2043
        %v2050 = vadd.f32 %v2036, %v2044
        %v2051 = vadd.f32 %v2037, %v2045
        %v2052 = vadd.f32 %v2038, %v2046
        %s2053 = sld [smem:[#allocation8 + $0x1f]]
        %v2054 = vstv %s2053
        %v2055 = vmul.f32 %v2054, %v1527
        %v2056 = vmul.f32 %v2054, %v1540
        %v2057 = vmul.f32 %v2054, %v1530
        %v2058 = vmul.f32 %v2054, %v1541
        %v2059 = vmul.f32 %v2054, %v1533
        %v2060 = vmul.f32 %v2054, %v1542
        %v2061 = vadd.f32 %v2047, %v2055
        %v2062 = vadd.f32 %v2048, %v2056
        %v2063 = vadd.f32 %v2049, %v2057
        %v2064 = vadd.f32 %v2050, %v2058
        %v2065 = vadd.f32 %v2051, %v2059
        %v2066 = vadd.f32 %v2052, %v2060
        %s2067 = sld [smem:[#allocation8 + $0x23]]
        %v2068 = vstv %s2067
        %v2069 = vmul.f32 %v2068, %v1545
        %v2070 = vmul.f32 %v2068, %v1558
        %v2071 = vmul.f32 %v2068, %v1548
        %v2072 = vmul.f32 %v2068, %v1559
        %v2073 = vmul.f32 %v2068, %v1551
        %v2074 = vmul.f32 %v2068, %v1560
        %v2075 = vadd.f32 %v2061, %v2069
        %v2076 = vadd.f32 %v2062, %v2070
        %v2077 = vadd.f32 %v2063, %v2071
        %v2078 = vadd.f32 %v2064, %v2072
        %v2079 = vadd.f32 %v2065, %v2073
        %v2080 = vadd.f32 %v2066, %v2074
        %vm2081 = vcmask 130048
        %2082 = vst.msk [vmem:[%s311] sm:$0xff] %vm2081, %v947
        %2083 = vst.msk [vmem:[%s311 + $0x8] sm:$0xff] %vm2081, %v948
        %2084 = vst.msk [vmem:[%s311 + $0x10] sm:$0xff] %vm2081, %v949
        %2085 = vst.msk [vmem:[%s311 + $0x18] sm:$0xff] %vm2081, %v950
        %2086 = vst.msk [vmem:[%s311 + $0x20] sm:$0xff] %vm2081, %v951
        %2087 = vst.msk [vmem:[%s311 + $0x28] sm:$0xff] %vm2081, %v952
        %s2088 = scalar_lea.vmem %s311, 96 [#allocation12]
        %2089 = vst.msk [vmem:[%s2088] sm:$0xff] %vm2081, %v1815
        %2090 = vst.msk [vmem:[%s2088 + $0x8] sm:$0xff] %vm2081, %v1816
        %2091 = vst.msk [vmem:[%s2088 + $0x10] sm:$0xff] %vm2081, %v1817
        %2092 = vst.msk [vmem:[%s2088 + $0x18] sm:$0xff] %vm2081, %v1818
        %2093 = vst.msk [vmem:[%s2088 + $0x20] sm:$0xff] %vm2081, %v1819
        %2094 = vst.msk [vmem:[%s2088 + $0x28] sm:$0xff] %vm2081, %v1820
        %s2095 = scalar_lea.vmem %s311, 48 [#allocation12]
        %2096 = vst.msk [vmem:[%s2095] sm:$0xff] %vm2081, %v1207
        %2097 = vst.msk [vmem:[%s2095 + $0x8] sm:$0xff] %vm2081, %v1208
        %2098 = vst.msk [vmem:[%s2095 + $0x10] sm:$0xff] %vm2081, %v1209
        %2099 = vst.msk [vmem:[%s2095 + $0x18] sm:$0xff] %vm2081, %v1210
        %2100 = vst.msk [vmem:[%s2095 + $0x20] sm:$0xff] %vm2081, %v1211
        %2101 = vst.msk [vmem:[%s2095 + $0x28] sm:$0xff] %vm2081, %v1212
        %s2102 = scalar_lea.vmem %s311, 144 [#allocation12]
        %2103 = vst.msk [vmem:[%s2102] sm:$0xff] %vm2081, %v2075
        %2104 = vst.msk [vmem:[%s2102 + $0x8] sm:$0xff] %vm2081, %v2076
        %2105 = vst.msk [vmem:[%s2102 + $0x10] sm:$0xff] %vm2081, %v2077
        %2106 = vst.msk [vmem:[%s2102 + $0x18] sm:$0xff] %vm2081, %v2078
        %2107 = vst.msk [vmem:[%s2102 + $0x20] sm:$0xff] %vm2081, %v2079
        %2108 = vst.msk [vmem:[%s2102 + $0x28] sm:$0xff] %vm2081, %v2080
        %s2109 = sand.u32 %s159, 1
        %s2110 = scalar_lea.sflag [#allocation4], %s2109
        %s2111 = sand.u32 %s159, 1
        %s2112 = smul.addr %s2111, 192
        %s2113 = scalar_lea.vmem [#allocation12], %s2112
        // Predicated region
        $region61: #{iconv2dxd_forward.1} parent=39 // pred_check
          %p2114 = pneg %p169
        $region62: #{iconv2dxd_forward.1} parent=39 // pred_check_branch
          %2116 = sbr.rel (%p2114) target = $region64
        $region63: #{iconv2dxd_forward.1} parent=39 // pred_region
          %s2117 = smul.u32 3, %s30
          %s2119 = ssub.s32 3072, 3072
          %2120 = vsyncadd %s2110, %s2119
          %s2121 = smul.addr %s2117, 2
          %s2122 = smul.addr %s29, 24
          %s2123 = sadd.s32 %s2121, %s2122
          %s2124 = smul.addr %s2123, 128
          %s2125 = scalar_lea.hbm %s5, %s2124
          %s2126 = sshll.u32 %s2113, 4
          %s2127 = int_to_ptr.vmem [resolvable:$true] %s2126
          %2132 = dma.vmem_to_hbm [thread:$0]  %s2127, 3072, %s2125, %s2110, 128, 128, 8
        $region64: #{iconv2dxd_forward.1} parent=39 // pred_fallthru
          _
      $region40: #{iconv2dxd_forward.1} parent=5 // pred_fallthru
        _
      %p2133 = scmp.le.s32.totalorder 2, %s20
      // Predicated region
      $region65: #{iconv2dxd_forward.1} parent=5 // pred_check
        %p2134 = pneg %p2133
      $region66: #{iconv2dxd_forward.1} parent=5 // pred_check_branch
        %2136 = sbr.rel (%p2134) target = $region68
      $region67: #{iconv2dxd_forward.1} parent=5 // pred_region
        %s2137 = ssub.s32 %s20, 2
        // Predicated region
        $region69: #{iconv2dxd_forward.1} parent=67 // pred_check
          %p2138 = pneg %p175
        $region70: #{iconv2dxd_forward.1} parent=67 // pred_check_branch
          %2140 = sbr.rel (%p2138) target = $region72
        $region71: #{iconv2dxd_forward.1} parent=67 // pred_region
          %s2141 = sand.u32 %s160, 1
          %s2142 = scalar_lea.sflag [#allocation4], %s2141
          %s2143 = sand.u32 %s160, 1
          %s2144 = smul.addr %s2143, 192
          %s2145 = scalar_lea.vmem [#allocation12], %s2144
          %2146 = dma.done %s2142, 3072
        $region72: #{iconv2dxd_forward.1} parent=67 // pred_fallthru
          _
      $region68: #{iconv2dxd_forward.1} parent=5 // pred_fallthru
        _
    $region6: #{iconv2dxd_forward.1} parent=1 // loop_footer
      %s24 = sadd.s32 1, %s20
    $region7: #{iconv2dxd_forward.1} parent=1 // loop_footer_branch
      %19 = sbr.rel target = $region3
    $region8: #{iconv2dxd_forward.1} parent=1 // loop_exit
      _
    %2147 = vsyncpa [#allocation3], 1
    %s2148 = scalar_lea.sflag [#allocation3], 1
    %2149 = vsyncpa %s2148, 1
    %2150 = vsyncpa [#allocation4], 1
    %s2151 = scalar_lea.sflag [#allocation4], 1
    %2152 = vsyncpa %s2151, 1
    %2153 = vsyncpa [#allocation5], 1
    %s2154 = scalar_lea.sflag [#allocation5], 1
    %2155 = vsyncpa %s2154, 1
    %2156 = vsyncpa [#allocation6], 1
    %s2157 = scalar_lea.sflag [#allocation6], 1
    %2158 = vsyncpa %s2157, 1
    %2159 = vsyncpa [#allocation9], 1

</llo_original>
